<compile_context>
chip_gen: v6e
topology: v6e:2x2x1
jax: 0.10.0
libtpu: 0.0.40
codegen_flags: <defaults>
</compile_context>

<pallas_src>
import functools

import jax
import jax.numpy as jnp
from jax.experimental import pallas as pl
from jax.experimental.pallas import tpu as pltpu

_LANES = 128


def mad_kernel(xsrc_ref, xdst_ref, xmid0_ref, xmid1_ref, mem0_ref, mem1_ref,
               wf_rep_ref, wg_rep_ref, wf_blk_ref, bg_rep_ref, ones_blk_ref,
               adapt_ref, out_ref, *, S):
    # ---- projections: bf16 operands on the MXU, f32 accumulation -------------
    # wf_rep / wg_rep = tile(w, (1, S))  -> each (tile_n, S*D) output holds the
    #   per-edge projected row repeated S times along lanes (lane-dense, no
    #   in-kernel broadcast needed).
    # wf_blk = kron(I_S, wf)             -> projects the (tile_n, S*F) gathered
    #   mid features straight into the same (tile_n, S*D) lane-dense layout
    #   (no (n, S, D) reshape).
    fsrc_w = jnp.dot(xsrc_ref[...], wf_rep_ref[...],
                     preferred_element_type=jnp.float32)
    fdst_w = jnp.dot(xdst_ref[...], wf_rep_ref[...],
                     preferred_element_type=jnp.float32)
    gsrc_w = jnp.dot(xsrc_ref[...], wg_rep_ref[...],
                     preferred_element_type=jnp.float32) + bg_rep_ref[...]
    gdst_w = jnp.dot(xdst_ref[...], wg_rep_ref[...],
                     preferred_element_type=jnp.float32) + bg_rep_ref[...]
    fmid0_w = jnp.dot(xmid0_ref[...], wf_blk_ref[...],
                      preferred_element_type=jnp.float32)
    fmid1_w = jnp.dot(xmid1_ref[...], wf_blk_ref[...],
                      preferred_element_type=jnp.float32)
    # (the f-bias bf cancels exactly in fsrc - fmid0 / fdst - fmid1, so it is
    #  dropped from both sides; g keeps its bias bg.)

    srcdiff = fsrc_w - fmid0_w                       # (tile_n, S*D) lane-dense f32
    dstdiff = fdst_w - fmid1_w

    # ---- per-(edge, sample) D-group reductions as tiny MXU matmuls -----------
    # ones_blk = kron(I_S, ones(D, 1)): prod @ ones_blk sums each D-group of
    # lanes -> (tile_n, S).  f32 x f32 dot (small), keeps distance precision.
    ones_blk = ones_blk_ref[...]
    logits1 = jnp.dot(srcdiff * gdst_w, ones_blk,
                      preferred_element_type=jnp.float32)            # (tile_n, S)
    logits2 = jnp.dot(dstdiff * gsrc_w, ones_blk,
                      preferred_element_type=jnp.float32)
    d1sq = jnp.dot(srcdiff * srcdiff, ones_blk,
                   preferred_element_type=jnp.float32)
    d2sq = jnp.dot(dstdiff * dstdiff, ones_blk,
                   preferred_element_type=jnp.float32)

    # recall(): nn.Linear(1, 1) applied elementwise to the gathered memory rows
    aw = adapt_ref[0]
    ab = adapt_ref[1]
    logits1 = logits1 + (aw * mem0_ref[...] + ab)
    logits2 = logits2 + (aw * mem1_ref[...] + ab)

    dist1 = jnp.sqrt(d1sq)
    dist2 = jnp.sqrt(d2sq)

    # ---- fused softmax tail ---------------------------------------------------
    # Equivalent to: logits = [l1, l2, zeros], dist = [d1, d2, ones],
    #                sigmoid(ip(logits, softmax(-dist, 1)))
    # The zeros/ones block never materializes (it only contributes
    # S * exp(-1 - m) to the denominator).
    neg_one = jnp.float32(-1.0)
    m = jnp.maximum(
        jnp.maximum(jnp.max(-dist1, axis=1, keepdims=True),
                    jnp.max(-dist2, axis=1, keepdims=True)),
        neg_one)                                                      # (tile_n, 1)
    e1 = jnp.exp(-dist1 - m)                                          # (tile_n, S)
    e2 = jnp.exp(-dist2 - m)
    e0 = jnp.exp(neg_one - m)                                         # (tile_n, 1)
    denom = (jnp.sum(e1, axis=1, keepdims=True)
             + jnp.sum(e2, axis=1, keepdims=True)
             + jnp.float32(S) * e0)
    num = (jnp.sum(logits1 * e1, axis=1, keepdims=True)
           + jnp.sum(logits2 * e2, axis=1, keepdims=True))

    # exact divide (review): one op on an otherwise idle unit, no accuracy loss
    sig = jax.nn.sigmoid(num / denom)                                 # (tile_n, 1)

    # lane-dense, unmasked store; the wrapper reads column 0
    out_ref[...] = jnp.broadcast_to(sig, out_ref.shape)


def mad_forward(xsrc, xdst, xmid0, xmid1, mem0, mem1, wf, bf, wg, bg, adapt,
                *, tile_n=128):
    """Forward pass of MAD for a batch of (src, dst) edges.

    xsrc, xdst: (n, F)   gathered node features
    xmid0, xmid1: (n, S, F) gathered sampled-mid features
    mem0, mem1: (n, S)   gathered memory entries for the two recall() calls
    """
    n, F = xsrc.shape
    S = xmid0.shape[1]
    D = wf.shape[1]
    del bf  # cancels exactly inside srcdiff / dstdiff

    # tile size: multiple of 16 (bf16 sublane packing), capped so per-tile VMEM
    # stays small; on v7x (64 MiB VMEM) keep tiles <= the v6e choice.
    tile_n = max(16, (min(int(tile_n), 128) // 16) * 16)
    n_pad = ((n + tile_n - 1) // tile_n) * tile_n
    num_tiles = n_pad // tile_n

    cast = lambda a: a.astype(jnp.bfloat16)

    # --- small resident weights (one-time DMA; constant index_map) ------------
    wf_rep = cast(jnp.tile(wf, (1, S)))                               # (F, S*D)
    wg_rep = cast(jnp.tile(wg, (1, S)))                               # (F, S*D)
    wf_blk = cast(jnp.kron(jnp.eye(S, dtype=wf.dtype), wf))           # (S*F, S*D)
    bg_rep = jnp.tile(bg.astype(jnp.float32), (1, S))                 # (1, S*D)
    ones_blk = jnp.kron(jnp.eye(S, dtype=jnp.float32),
                        jnp.ones((D, 1), jnp.float32))                # (S*D, S)
    adapt_1d = adapt.reshape(2).astype(jnp.float32)                   # SMEM scalars

    # --- per-edge operands: no concatenation of the large mid features; the
    # (n, S, F) -> (n, S*F) reshape is a free row-major view in HBM.
    xsrc_b = cast(xsrc)
    xdst_b = cast(xdst)
    xmid0_w = cast(xmid0.reshape(n, S * F))
    xmid1_w = cast(xmid1.reshape(n, S * F))
    mem0_f = mem0.astype(jnp.float32)
    mem1_f = mem1.astype(jnp.float32)

    def pad_rows(a):
        if a.shape[0] == n_pad:
            return a
        return jnp.pad(a, ((0, n_pad - a.shape[0]),) + ((0, 0),) * (a.ndim - 1))

    xsrc_b, xdst_b, xmid0_w, xmid1_w, mem0_f, mem1_f = map(
        pad_rows, (xsrc_b, xdst_b, xmid0_w, xmid1_w, mem0_f, mem1_f))

    row_spec = lambda width: pl.BlockSpec((tile_n, width), lambda i: (i, 0))
    resident = lambda shape: pl.BlockSpec(shape, lambda i: (0, 0))

    out = pl.pallas_call(
        functools.partial(mad_kernel, S=S),
        out_shape=jax.ShapeDtypeStruct((n_pad, _LANES), jnp.float32),
        grid=(num_tiles,),
        in_specs=[
            row_spec(F),                      # xsrc
            row_spec(F),                      # xdst
            row_spec(S * F),                  # xmid0 (n, S*F)
            row_spec(S * F),                  # xmid1 (n, S*F)
            row_spec(S),                      # mem0
            row_spec(S),                      # mem1
            resident((F, S * D)),             # wf_rep
            resident((F, S * D)),             # wg_rep
            resident((S * F, S * D)),         # wf_blk
            resident((1, S * D)),             # bg_rep
            resident((S * D, S)),             # ones_blk
            pl.BlockSpec(memory_space=pltpu.MemorySpace.SMEM),   # adapt (w, b)
        ],
        out_specs=pl.BlockSpec((tile_n, _LANES), lambda i: (i, 0)),
        compiler_params=pltpu.CompilerParams(
            dimension_semantics=("parallel",),
            vmem_limit_bytes=32 * 1024 * 1024),
    )(xsrc_b, xdst_b, xmid0_w, xmid1_w, mem0_f, mem1_f,
      wf_rep, wg_rep, wf_blk, bg_rep, ones_blk, adapt_1d)

    return out[:n, 0]


if __name__ == "__main__":
    key = jax.random.PRNGKey(0)
    n_nodes = 32       # graph.num_nodes() (small synthetic stand-in)
    in_feats = 32      # F
    node_feats = 16    # D
    n_samples = 8      # S   (S*D = 128 -> one full vreg width)
    n = 32             # number of (src, dst) edge pairs

    ks = jax.random.split(key, 10)
    feats = jax.random.normal(ks[0], (n_nodes, in_feats), jnp.float32)
    mem = jax.random.normal(ks[1], (n_nodes, n_nodes), jnp.float32)

    # deterministic Linear parameters: f, g (in_feats -> node_feats), adapt (1 -> 1)
    wf = jax.random.normal(ks[2], (in_feats, node_feats), jnp.float32) / jnp.sqrt(in_feats)
    bf = jax.random.normal(ks[3], (1, node_feats), jnp.float32) * 0.01
    wg = jax.random.normal(ks[4], (in_feats, node_feats), jnp.float32) / jnp.sqrt(in_feats)
    bg = jax.random.normal(ks[5], (1, node_feats), jnp.float32) * 0.01
    adapt = jnp.array([[0.7, -0.1]], jnp.float32)   # (weight, bias) of nn.Linear(1, 1)

    src = jax.random.randint(ks[6], (n,), 0, n_nodes)
    dst = jax.random.randint(ks[7], (n,), 0, n_nodes)
    # torch.randint(0, n_nodes, (n, n_samples)) done deterministically with JAX keys
    mid0 = jax.random.randint(ks[8], (n, n_samples), 0, n_nodes)
    mid1 = jax.random.randint(ks[9], (n, n_samples), 0, n_nodes)

    # Glue: data-dependent gathers in plain JAX (see TODO at top for in-kernel DMA)
    xsrc = feats[src]                      # (n, F)
    xdst = feats[dst]                      # (n, F)
    xmid0 = feats[mid0]                    # (n, S, F)
    xmid1 = feats[mid1]                    # (n, S, F)
    mem0 = mem[mid0, dst[:, None]]         # (n, S)  -> recall(mid0, dst.unsqueeze(1))
    mem1 = mem[src[:, None], mid1]         # (n, S)  -> recall(src.unsqueeze(1), mid1)

    out = mad_forward(xsrc, xdst, xmid0, xmid1, mem0, mem1,
                      wf, bf, wg, bg, adapt, tile_n=16)   # grid=(2,) at n=32
    out = jax.block_until_ready(out)
    assert out.shape == (n,)

    # pure-JAX reference (same math as the PyTorch forward)
    def ref_forward(xsrc_, xdst_, xmid0_, xmid1_, wf_, wg_):
        fsrc = xsrc_ @ wf_ + bf
        fdst = xdst_ @ wf_ + bf
        gsrc = xsrc_ @ wg_ + bg
        gdst = xdst_ @ wg_ + bg
        fmid0 = jnp.einsum('nsf,fd->nsd', xmid0_, wf_) + bf
        fmid1 = jnp.einsum('nsf,fd->nsd', xmid1_, wf_) + bf
        srcdiff = fsrc[:, None] - fmid0
        dstdiff = fdst[:, None] - fmid1
        l1 = jnp.sum(srcdiff * gdst[:, None], -1) + (adapt[0, 0] * mem0 + adapt[0, 1])
        l2 = jnp.sum(dstdiff * gsrc[:, None], -1) + (adapt[0, 0] * mem1 + adapt[0, 1])
        logits = jnp.concatenate([l1, l2, jnp.zeros((n, n_samples), jnp.float32)], 1)
        dist = jnp.concatenate([jnp.linalg.norm(srcdiff, axis=2),
                                jnp.linalg.norm(dstdiff, axis=2),
                                jnp.ones((n, n_samples), jnp.float32)], 1)
        w = jax.nn.softmax(-dist, axis=1)
        return jax.nn.sigmoid(jnp.sum(logits * w, axis=1))

    # (a) same-precision reference: inputs pre-quantized to bf16, math in f32 —
    #     isolates kernel correctness from the (requested) bf16 matmul inputs.
    q = lambda a: a.astype(jnp.bfloat16).astype(jnp.float32)
    r_bf16 = ref_forward(q(xsrc), q(xdst), q(xmid0), q(xmid1), q(wf), q(wg))
    assert jnp.allclose(out, r_bf16, atol=5e-3, rtol=5e-3), (out, r_bf16)

    # (b) full-f32 reference: only differs by the bf16 input quantization.
    r_f32 = ref_forward(xsrc, xdst, xmid0, xmid1, wf, wg)
    assert jnp.allclose(out, r_f32, atol=5e-2, rtol=5e-2), (out, r_f32)

    print("KERNEL_OK")
</pallas_src>

<mosaic_0001>
module attributes {stable_mosaic.version = 11 : i64} {
  func.func @mad_kernel(%arg0: i32, %arg1: memref<16x32xbf16, #tpu.memory_space<vmem>>, %arg2: memref<16x32xbf16, #tpu.memory_space<vmem>>, %arg3: memref<16x256xbf16, #tpu.memory_space<vmem>>, %arg4: memref<16x256xbf16, #tpu.memory_space<vmem>>, %arg5: memref<16x8xf32, #tpu.memory_space<vmem>>, %arg6: memref<16x8xf32, #tpu.memory_space<vmem>>, %arg7: memref<32x128xbf16, #tpu.memory_space<vmem>>, %arg8: memref<32x128xbf16, #tpu.memory_space<vmem>>, %arg9: memref<256x128xbf16, #tpu.memory_space<vmem>>, %arg10: memref<1x128xf32, #tpu.memory_space<vmem>>, %arg11: memref<128x8xf32, #tpu.memory_space<vmem>>, %arg12: memref<2xf32, #tpu.memory_space<smem>>, %arg13: memref<16x128xf32, #tpu.memory_space<vmem>>) attributes {dimension_semantics = [#tpu.dimension_semantics<parallel>], iteration_bounds = array<i64: 2>, scalar_prefetch = 0 : i64, scratch_operands = 0 : i64, tpu.core_type = #tpu.core_type<tc>, window_params = [{transform_indices = @transform_0, window_bounds = array<i64: 16, 32>}, {transform_indices = @transform_1, window_bounds = array<i64: 16, 32>}, {transform_indices = @transform_2, window_bounds = array<i64: 16, 256>}, {transform_indices = @transform_3, window_bounds = array<i64: 16, 256>}, {transform_indices = @transform_4, window_bounds = array<i64: 16, 8>}, {transform_indices = @transform_5, window_bounds = array<i64: 16, 8>}, {pipeline_mode = #tpu.pipeline_mode<synchronous>, transform_indices = @transform_6, window_bounds = array<i64: 32, 128>}, {pipeline_mode = #tpu.pipeline_mode<synchronous>, transform_indices = @transform_7, window_bounds = array<i64: 32, 128>}, {pipeline_mode = #tpu.pipeline_mode<synchronous>, transform_indices = @transform_8, window_bounds = array<i64: 256, 128>}, {pipeline_mode = #tpu.pipeline_mode<synchronous>, transform_indices = @transform_9, window_bounds = array<i64: 1, 128>}, {pipeline_mode = #tpu.pipeline_mode<synchronous>, transform_indices = @transform_10, window_bounds = array<i64: 128, 8>}, {transform_indices = @transform_11, window_bounds = array<i64: 2>}, {transform_indices = @transform_12, window_bounds = array<i64: 16, 128>}]} {
    %c0 = arith.constant 0 : index
    %c0_0 = arith.constant 0 : index
    %0 = vector.load %arg1[%c0, %c0_0] : memref<16x32xbf16, #tpu.memory_space<vmem>>, vector<16x32xbf16>
    %c0_1 = arith.constant 0 : index
    %c0_2 = arith.constant 0 : index
    %1 = vector.load %arg7[%c0_1, %c0_2] : memref<32x128xbf16, #tpu.memory_space<vmem>>, vector<32x128xbf16>
    %cst = arith.constant dense<0.000000e+00> : vector<16x128xf32>
    %2 = tpu.matmul %0, %1, %cst {dimension_numbers = #tpu.dot_dimension_numbers<[1], [0], [0], [1], [0, 0, 1, 1], [], []>} : vector<16x32xbf16>, vector<32x128xbf16>, vector<16x128xf32> -> vector<16x128xf32>
    %c0_3 = arith.constant 0 : index
    %c0_4 = arith.constant 0 : index
    %3 = vector.load %arg2[%c0_3, %c0_4] : memref<16x32xbf16, #tpu.memory_space<vmem>>, vector<16x32xbf16>
    %c0_5 = arith.constant 0 : index
    %c0_6 = arith.constant 0 : index
    %4 = vector.load %arg7[%c0_5, %c0_6] : memref<32x128xbf16, #tpu.memory_space<vmem>>, vector<32x128xbf16>
    %cst_7 = arith.constant dense<0.000000e+00> : vector<16x128xf32>
    %5 = tpu.matmul %3, %4, %cst_7 {dimension_numbers = #tpu.dot_dimension_numbers<[1], [0], [0], [1], [0, 0, 1, 1], [], []>} : vector<16x32xbf16>, vector<32x128xbf16>, vector<16x128xf32> -> vector<16x128xf32>
    %c0_8 = arith.constant 0 : index
    %c0_9 = arith.constant 0 : index
    %6 = vector.load %arg1[%c0_8, %c0_9] : memref<16x32xbf16, #tpu.memory_space<vmem>>, vector<16x32xbf16>
    %c0_10 = arith.constant 0 : index
    %c0_11 = arith.constant 0 : index
    %7 = vector.load %arg8[%c0_10, %c0_11] : memref<32x128xbf16, #tpu.memory_space<vmem>>, vector<32x128xbf16>
    %cst_12 = arith.constant dense<0.000000e+00> : vector<16x128xf32>
    %8 = tpu.matmul %6, %7, %cst_12 {dimension_numbers = #tpu.dot_dimension_numbers<[1], [0], [0], [1], [0, 0, 1, 1], [], []>} : vector<16x32xbf16>, vector<32x128xbf16>, vector<16x128xf32> -> vector<16x128xf32>
    %c0_13 = arith.constant 0 : index
    %c0_14 = arith.constant 0 : index
    %9 = vector.load %arg10[%c0_13, %c0_14] : memref<1x128xf32, #tpu.memory_space<vmem>>, vector<1x128xf32>
    %10 = vector.broadcast %9 : vector<1x128xf32> to vector<16x128xf32>
    %11 = arith.addf %8, %10 : vector<16x128xf32>
    %c0_15 = arith.constant 0 : index
    %c0_16 = arith.constant 0 : index
    %12 = vector.load %arg2[%c0_15, %c0_16] : memref<16x32xbf16, #tpu.memory_space<vmem>>, vector<16x32xbf16>
    %c0_17 = arith.constant 0 : index
    %c0_18 = arith.constant 0 : index
    %13 = vector.load %arg8[%c0_17, %c0_18] : memref<32x128xbf16, #tpu.memory_space<vmem>>, vector<32x128xbf16>
    %cst_19 = arith.constant dense<0.000000e+00> : vector<16x128xf32>
    %14 = tpu.matmul %12, %13, %cst_19 {dimension_numbers = #tpu.dot_dimension_numbers<[1], [0], [0], [1], [0, 0, 1, 1], [], []>} : vector<16x32xbf16>, vector<32x128xbf16>, vector<16x128xf32> -> vector<16x128xf32>
    %c0_20 = arith.constant 0 : index
    %c0_21 = arith.constant 0 : index
    %15 = vector.load %arg10[%c0_20, %c0_21] : memref<1x128xf32, #tpu.memory_space<vmem>>, vector<1x128xf32>
    %16 = vector.broadcast %15 : vector<1x128xf32> to vector<16x128xf32>
    %17 = arith.addf %14, %16 : vector<16x128xf32>
    %c0_22 = arith.constant 0 : index
    %c0_23 = arith.constant 0 : index
    %18 = vector.load %arg3[%c0_22, %c0_23] : memref<16x256xbf16, #tpu.memory_space<vmem>>, vector<16x256xbf16>
    %c0_24 = arith.constant 0 : index
    %c0_25 = arith.constant 0 : index
    %19 = vector.load %arg9[%c0_24, %c0_25] : memref<256x128xbf16, #tpu.memory_space<vmem>>, vector<256x128xbf16>
    %cst_26 = arith.constant dense<0.000000e+00> : vector<16x128xf32>
    %20 = tpu.matmul %18, %19, %cst_26 {dimension_numbers = #tpu.dot_dimension_numbers<[1], [0], [0], [1], [0, 0, 1, 1], [], []>} : vector<16x256xbf16>, vector<256x128xbf16>, vector<16x128xf32> -> vector<16x128xf32>
    %c0_27 = arith.constant 0 : index
    %c0_28 = arith.constant 0 : index
    %21 = vector.load %arg4[%c0_27, %c0_28] : memref<16x256xbf16, #tpu.memory_space<vmem>>, vector<16x256xbf16>
    %c0_29 = arith.constant 0 : index
    %c0_30 = arith.constant 0 : index
    %22 = vector.load %arg9[%c0_29, %c0_30] : memref<256x128xbf16, #tpu.memory_space<vmem>>, vector<256x128xbf16>
    %cst_31 = arith.constant dense<0.000000e+00> : vector<16x128xf32>
    %23 = tpu.matmul %21, %22, %cst_31 {dimension_numbers = #tpu.dot_dimension_numbers<[1], [0], [0], [1], [0, 0, 1, 1], [], []>} : vector<16x256xbf16>, vector<256x128xbf16>, vector<16x128xf32> -> vector<16x128xf32>
    %24 = arith.subf %2, %20 : vector<16x128xf32>
    %25 = arith.subf %5, %23 : vector<16x128xf32>
    %c0_32 = arith.constant 0 : index
    %c0_33 = arith.constant 0 : index
    %26 = vector.load %arg11[%c0_32, %c0_33] : memref<128x8xf32, #tpu.memory_space<vmem>>, vector<128x8xf32>
    %27 = arith.mulf %24, %17 : vector<16x128xf32>
    %cst_34 = arith.constant dense<0.000000e+00> : vector<16x8xf32>
    %28 = tpu.matmul %27, %26, %cst_34 {dimension_numbers = #tpu.dot_dimension_numbers<[1], [0], [0], [1], [0, 0, 1, 1], [], []>} : vector<16x128xf32>, vector<128x8xf32>, vector<16x8xf32> -> vector<16x8xf32>
    %29 = arith.mulf %25, %11 : vector<16x128xf32>
    %cst_35 = arith.constant dense<0.000000e+00> : vector<16x8xf32>
    %30 = tpu.matmul %29, %26, %cst_35 {dimension_numbers = #tpu.dot_dimension_numbers<[1], [0], [0], [1], [0, 0, 1, 1], [], []>} : vector<16x128xf32>, vector<128x8xf32>, vector<16x8xf32> -> vector<16x8xf32>
    %31 = arith.mulf %24, %24 : vector<16x128xf32>
    %cst_36 = arith.constant dense<0.000000e+00> : vector<16x8xf32>
    %32 = tpu.matmul %31, %26, %cst_36 {dimension_numbers = #tpu.dot_dimension_numbers<[1], [0], [0], [1], [0, 0, 1, 1], [], []>} : vector<16x128xf32>, vector<128x8xf32>, vector<16x8xf32> -> vector<16x8xf32>
    %33 = arith.mulf %25, %25 : vector<16x128xf32>
    %cst_37 = arith.constant dense<0.000000e+00> : vector<16x8xf32>
    %34 = tpu.matmul %33, %26, %cst_37 {dimension_numbers = #tpu.dot_dimension_numbers<[1], [0], [0], [1], [0, 0, 1, 1], [], []>} : vector<16x128xf32>, vector<128x8xf32>, vector<16x8xf32> -> vector<16x8xf32>
    %c0_38 = arith.constant 0 : index
    %35 = memref.load %arg12[%c0_38] : memref<2xf32, #tpu.memory_space<smem>>
    %c1 = arith.constant 1 : index
    %36 = memref.load %arg12[%c1] : memref<2xf32, #tpu.memory_space<smem>>
    %c0_39 = arith.constant 0 : index
    %c0_40 = arith.constant 0 : index
    %37 = vector.load %arg5[%c0_39, %c0_40] : memref<16x8xf32, #tpu.memory_space<vmem>>, vector<16x8xf32>
    %38 = vector.broadcast %35 : f32 to vector<16x8xf32>
    %39 = arith.mulf %38, %37 : vector<16x8xf32>
    %40 = vector.broadcast %36 : f32 to vector<16x8xf32>
    %41 = arith.addf %39, %40 : vector<16x8xf32>
    %42 = arith.addf %28, %41 : vector<16x8xf32>
    %c0_41 = arith.constant 0 : index
    %c0_42 = arith.constant 0 : index
    %43 = vector.load %arg6[%c0_41, %c0_42] : memref<16x8xf32, #tpu.memory_space<vmem>>, vector<16x8xf32>
    %44 = vector.broadcast %35 : f32 to vector<16x8xf32>
    %45 = arith.mulf %44, %43 : vector<16x8xf32>
    %46 = vector.broadcast %36 : f32 to vector<16x8xf32>
    %47 = arith.addf %45, %46 : vector<16x8xf32>
    %48 = arith.addf %30, %47 : vector<16x8xf32>
    %49 = math.sqrt %32 : vector<16x8xf32>
    %50 = math.sqrt %34 : vector<16x8xf32>
    %cst_43 = arith.constant 0.000000e+00 : f32
    %51 = vector.broadcast %cst_43 : f32 to vector<16x8xf32>
    %52 = arith.subf %51, %49 : vector<16x8xf32>
    %cst_44 = arith.constant dense<0xFF800000> : vector<16xf32>
    %53 = vector.multi_reduction <maximumf>, %52, %cst_44 [1] : vector<16x8xf32> to vector<16xf32>
    %54 = vector.shape_cast %53 : vector<16xf32> to vector<16x1xf32>
    %cst_45 = arith.constant 0.000000e+00 : f32
    %55 = vector.broadcast %cst_45 : f32 to vector<16x8xf32>
    %56 = arith.subf %55, %50 : vector<16x8xf32>
    %cst_46 = arith.constant dense<0xFF800000> : vector<16xf32>
    %57 = vector.multi_reduction <maximumf>, %56, %cst_46 [1] : vector<16x8xf32> to vector<16xf32>
    %58 = vector.shape_cast %57 : vector<16xf32> to vector<16x1xf32>
    %59 = arith.maximumf %54, %58 : vector<16x1xf32>
    %cst_47 = arith.constant -1.000000e+00 : f32
    %60 = vector.broadcast %cst_47 : f32 to vector<16x1xf32>
    %61 = arith.maximumf %59, %60 : vector<16x1xf32>
    %cst_48 = arith.constant 0.000000e+00 : f32
    %62 = vector.broadcast %cst_48 : f32 to vector<16x8xf32>
    %63 = arith.subf %62, %49 : vector<16x8xf32>
    %64 = vector.broadcast %61 : vector<16x1xf32> to vector<16x8xf32>
    %65 = arith.subf %63, %64 : vector<16x8xf32>
    %66 = math.exp %65 : vector<16x8xf32>
    %cst_49 = arith.constant 0.000000e+00 : f32
    %67 = vector.broadcast %cst_49 : f32 to vector<16x8xf32>
    %68 = arith.subf %67, %50 : vector<16x8xf32>
    %69 = vector.broadcast %61 : vector<16x1xf32> to vector<16x8xf32>
    %70 = arith.subf %68, %69 : vector<16x8xf32>
    %71 = math.exp %70 : vector<16x8xf32>
    %cst_50 = arith.constant -1.000000e+00 : f32
    %72 = vector.broadcast %cst_50 : f32 to vector<16x1xf32>
    %73 = arith.subf %72, %61 : vector<16x1xf32>
    %74 = math.exp %73 : vector<16x1xf32>
    %cst_51 = arith.constant dense<0.000000e+00> : vector<16xf32>
    %75 = vector.multi_reduction <add>, %66, %cst_51 [1] : vector<16x8xf32> to vector<16xf32>
    %76 = vector.shape_cast %75 : vector<16xf32> to vector<16x1xf32>
    %cst_52 = arith.constant dense<0.000000e+00> : vector<16xf32>
    %77 = vector.multi_reduction <add>, %71, %cst_52 [1] : vector<16x8xf32> to vector<16xf32>
    %78 = vector.shape_cast %77 : vector<16xf32> to vector<16x1xf32>
    %79 = arith.addf %76, %78 : vector<16x1xf32>
    %cst_53 = arith.constant 8.000000e+00 : f32
    %80 = vector.broadcast %cst_53 : f32 to vector<16x1xf32>
    %81 = arith.mulf %80, %74 : vector<16x1xf32>
    %82 = arith.addf %79, %81 : vector<16x1xf32>
    %83 = arith.mulf %42, %66 : vector<16x8xf32>
    %cst_54 = arith.constant dense<0.000000e+00> : vector<16xf32>
    %84 = vector.multi_reduction <add>, %83, %cst_54 [1] : vector<16x8xf32> to vector<16xf32>
    %85 = vector.shape_cast %84 : vector<16xf32> to vector<16x1xf32>
    %86 = arith.mulf %48, %71 : vector<16x8xf32>
    %cst_55 = arith.constant dense<0.000000e+00> : vector<16xf32>
    %87 = vector.multi_reduction <add>, %86, %cst_55 [1] : vector<16x8xf32> to vector<16xf32>
    %88 = vector.shape_cast %87 : vector<16xf32> to vector<16x1xf32>
    %89 = arith.addf %85, %88 : vector<16x1xf32>
    %90 = arith.divf %89, %82 : vector<16x1xf32>
    %91 = arith.negf %90 : vector<16x1xf32>
    %92 = math.exp %91 : vector<16x1xf32>
    %cst_56 = arith.constant 1.000000e+00 : f32
    %93 = vector.broadcast %cst_56 : f32 to vector<16x1xf32>
    %94 = arith.addf %93, %92 : vector<16x1xf32>
    %95 = arith.divf %93, %94 : vector<16x1xf32>
    %96 = vector.shape_cast %95 : vector<16x1xf32> to vector<16x1xf32>
    %97 = vector.broadcast %96 : vector<16x1xf32> to vector<16x128xf32>
    %c0_57 = arith.constant 0 : index
    %c0_58 = arith.constant 0 : index
    %98 = vector.load %arg13[%c0_57, %c0_58] : memref<16x128xf32, #tpu.memory_space<vmem>>, vector<16x128xf32>
    tpu.vector_store %arg13[%c0_57, %c0_58], %97 {strides = array<i32>} : memref<16x128xf32, #tpu.memory_space<vmem>>, vector<16x128xf32>,
    return
  }
  func.func @transform_0(%arg0: i32) -> (i32, i32) {
    %c0_i32 = arith.constant 0 : i32
    %c0_i32_0 = arith.constant 0 : i32
    return %arg0, %c0_i32 : i32, i32
  }
  func.func @transform_1(%arg0: i32) -> (i32, i32) {
    %c0_i32 = arith.constant 0 : i32
    %c0_i32_0 = arith.constant 0 : i32
    return %arg0, %c0_i32 : i32, i32
  }
  func.func @transform_2(%arg0: i32) -> (i32, i32) {
    %c0_i32 = arith.constant 0 : i32
    %c0_i32_0 = arith.constant 0 : i32
    return %arg0, %c0_i32 : i32, i32
  }
  func.func @transform_3(%arg0: i32) -> (i32, i32) {
    %c0_i32 = arith.constant 0 : i32
    %c0_i32_0 = arith.constant 0 : i32
    return %arg0, %c0_i32 : i32, i32
  }
  func.func @transform_4(%arg0: i32) -> (i32, i32) {
    %c0_i32 = arith.constant 0 : i32
    %c0_i32_0 = arith.constant 0 : i32
    return %arg0, %c0_i32 : i32, i32
  }
  func.func @transform_5(%arg0: i32) -> (i32, i32) {
    %c0_i32 = arith.constant 0 : i32
    %c0_i32_0 = arith.constant 0 : i32
    return %arg0, %c0_i32 : i32, i32
  }
  func.func @transform_6(%arg0: i32) -> (i32, i32) {
    %c0_i32 = arith.constant 0 : i32
    %c0_i32_0 = arith.constant 0 : i32
    %c0_i32_1 = arith.constant 0 : i32
    return %c0_i32, %c0_i32_0 : i32, i32
  }
  func.func @transform_7(%arg0: i32) -> (i32, i32) {
    %c0_i32 = arith.constant 0 : i32
    %c0_i32_0 = arith.constant 0 : i32
    %c0_i32_1 = arith.constant 0 : i32
    return %c0_i32, %c0_i32_0 : i32, i32
  }
  func.func @transform_8(%arg0: i32) -> (i32, i32) {
    %c0_i32 = arith.constant 0 : i32
    %c0_i32_0 = arith.constant 0 : i32
    %c0_i32_1 = arith.constant 0 : i32
    return %c0_i32, %c0_i32_0 : i32, i32
  }
  func.func @transform_9(%arg0: i32) -> (i32, i32) {
    %c0_i32 = arith.constant 0 : i32
    %c0_i32_0 = arith.constant 0 : i32
    %c0_i32_1 = arith.constant 0 : i32
    return %c0_i32, %c0_i32_0 : i32, i32
  }
  func.func @transform_10(%arg0: i32) -> (i32, i32) {
    %c0_i32 = arith.constant 0 : i32
    %c0_i32_0 = arith.constant 0 : i32
    %c0_i32_1 = arith.constant 0 : i32
    return %c0_i32, %c0_i32_0 : i32, i32
  }
  func.func @transform_11(%arg0: i32) -> i32 {
    %c0_i32 = arith.constant 0 : i32
    %c0_i32_0 = arith.constant 0 : i32
    return %c0_i32 : i32
  }
  func.func @transform_12(%arg0: i32) -> (i32, i32) {
    %c0_i32 = arith.constant 0 : i32
    %c0_i32_0 = arith.constant 0 : i32
    return %arg0, %c0_i32 : i32, i32
  }
}

</mosaic_0001>

<llo_original>
// kernel: tpu_custom_call.1
$region0: #{tpu_custom_call.1}
  #allocation0 [shape = 'u32[]', space=smem, size = 0x4, offset = 0x4, fixed_abs, tag = 'smem constant byte address 0x4 - core index']
  #allocation1 [shape = 'u32[144,128]{1,0:T(1,128)}', space=vmem, size = 0x12000, scoped, tag = 'internal scratch']
  %s0 = inlined_call_operand.vmem [shape: bf16[32,32], index: 0, kind: input, shape index: {}]
  %s1 = inlined_call_operand.vmem [shape: bf16[32,32], index: 1, kind: input, shape index: {}]
  %s2 = inlined_call_operand.vmem [shape: bf16[32,256], index: 2, kind: input, shape index: {}]
  %s3 = inlined_call_operand.vmem [shape: bf16[32,256], index: 3, kind: input, shape index: {}]
  %s4 = inlined_call_operand.vmem [shape: f32[32,8], index: 4, kind: input, shape index: {}]
  %s5 = inlined_call_operand.vmem [shape: f32[32,8], index: 5, kind: input, shape index: {}]
  %s6 = inlined_call_operand.hbm [shape: bf16[32,128], index: 6, kind: input, shape index: {}]
  %s7 = inlined_call_operand.hbm [shape: bf16[32,128], index: 7, kind: input, shape index: {}]
  %s8 = inlined_call_operand.vmem [shape: bf16[256,128], index: 8, kind: input, shape index: {}]
  %s9 = inlined_call_operand.hbm [shape: f32[1,128], index: 9, kind: input, shape index: {}]
  %s10 = inlined_call_operand.vmem [shape: f32[128,8], index: 10, kind: input, shape index: {}]
  %s11 = inlined_call_operand.vmem [shape: f32[2], index: 11, kind: input, shape index: {}]
  %s12 = inlined_call_operand.hbm [shape: f32[32,128], index: 12, kind: output, shape index: {}]
  %s13 = sld [smem:[#allocation0]]
  $region97: #{tpu_custom_call.1} parent=0
    _
  %s15 = ssub.s32 1, %s13
  %s16 = scalar_select 0, %s15, %s13
  $region1: #{tpu_custom_call.1} parent=0
    #allocation2 [shape = 'u8[8192]{0}', space=vmem, size = 0x2000, scoped, tag = 'input window, operand 6, single buffered']
    #allocation3 [shape = 's32[2]{0}', space=sflag, size = 0x8, scoped, tag = 'scoped memory for tpu_custom_call.1']
    #allocation4 [shape = 's32[2]{0}', space=sflag, size = 0x8, scoped, tag = 'scoped memory for tpu_custom_call.1']
    #allocation5 [shape = 's32[2]{0}', space=sflag, size = 0x8, scoped, tag = 'scoped memory for tpu_custom_call.1']
    #allocation6 [shape = 'u8[8192]{0}', space=vmem, size = 0x2000, scoped, tag = 'input window, operand 7, single buffered']
    #allocation7 [shape = 's32[1]{0}', space=sflag, size = 0x4, scoped, tag = 'scoped memory for tpu_custom_call.1']
    #allocation8 [shape = 'u8[512]{0}', space=vmem, size = 0x400, scoped, tag = 'input window, operand 9, single buffered']
    #allocation9 [shape = 'u8[512]{0}', space=smem, size = 0x200, scoped, tag = 'input window, operand 11, single buffered']
    #allocation10 [shape = 'u8[16384]{0}', space=vmem, size = 0x4000, scoped, tag = 'output window, operand 0']
    %17 = vsyncpa [#allocation3], 0
    %18 = vsyncpa [#allocation7], 0
    %19 = vsyncpa [#allocation5], 0
    %20 = vsyncpa [#allocation4], 0
    %s21 = scalar_lea.sflag [#allocation4], 1
    %22 = vsyncpa %s21, 0
    loop: start=0, step=1, limit=4
    $region2: #{tpu_custom_call.1} parent=1 // loop_pre_header
      _
    $region3: #{tpu_custom_call.1} parent=1 // loop_header
      %s24 = sphi 0, %s28
      %p25 = scmp.ge.s32.totalorder %s24, 4
      %s34 = sphi 0, %s36
      %s37 = sphi 0, %s34
      %s38 = sphi 0, %s37
      %s54 = sphi 0, %s38
      %s60 = sphi 0, %s62
      %s63 = sphi 0, %s60
      %s64 = sphi 0, %s63
      %s80 = sphi 0, %s64
      %s86 = sphi 0, %s88
      %s89 = sphi 0, %s86
      %s90 = sphi 0, %s89
      %s106 = sphi 0, %s90
      %s112 = sphi 0, %s114
      %s115 = sphi 0, %s112
      %s116 = sphi 0, %s115
      %s132 = sphi 0, %s116
      %s138 = sphi 0, %s140
      %s141 = sphi 0, %s138
      %s142 = sphi 0, %s141
      %s158 = sphi 0, %s142
      %s164 = sphi 0, %s166
      %s167 = sphi 0, %s164
      %s168 = sphi 0, %s167
      %s184 = sphi 0, %s168
      %s188 = sphi 0, %s188
      %s190 = sphi 0, %s188
      %s191 = sphi 0, %s190
      %s205 = sphi 0, %s191
      %s209 = sphi 0, %s209
      %s211 = sphi 0, %s209
      %s212 = sphi 0, %s211
      %s226 = sphi 0, %s212
      %s230 = sphi 0, %s230
      %s232 = sphi 0, %s230
      %s233 = sphi 0, %s232
      %s247 = sphi 0, %s233
      %s251 = sphi 0, %s251
      %s253 = sphi 0, %s251
      %s254 = sphi 0, %s253
      %s268 = sphi 0, %s254
      %s272 = sphi 0, %s272
      %s274 = sphi 0, %s272
      %s275 = sphi 0, %s274
      %s289 = sphi 0, %s275
      %s293 = sphi 0, %s293
      %s295 = sphi 0, %s293
      %s296 = sphi 0, %s295
      %s310 = sphi 0, %s296
      %s316 = sphi 0, %s318
      %s319 = sphi 0, %s316
      %s320 = sphi 0, %s319
      %s336 = sphi 0, %s320
    $region4: #{tpu_custom_call.1} parent=1 // loop_header_branch
      %27 = sbr.rel (%p25) target = $region8
    $region5: #{tpu_custom_call.1} parent=1 // loop_body
      %s29 = ssub.s32 %s24, 1
      %s30 = ssub.s32 %s24, 2
      %s31 = sadd.s32 %s24, 1
      %s32 = ssub.s32 %s24, %s31
      %p33 = scmp.eq.s32.totalorder %s32, 0
      %s35 = sadd.s32 %s34, 1
      %s36 = scalar_select %p33, %s34, %s35
      %p39 = pneg %p33
      %p40 = scmp.eq.s32.totalorder %s24, 1
      %p41 = por %p39, %p40
      %p42 = scmp.ne.s32.totalorder %s34, %s37
      %p43 = scmp.eq.s32.totalorder %s24, 0
      %p44 = por %p42, %p43
      %p45 = scmp.ne.s32.totalorder %s34, %s37
      %p46 = scmp.eq.s32.totalorder %s29, 1
      %p47 = por %p45, %p46
      %p48 = scmp.ne.s32.totalorder %s37, %s38
      %p49 = scmp.eq.s32.totalorder %s29, 0
      %p50 = por %p48, %p49
      %p51 = scmp.ne.s32.totalorder %s37, %s38
      %p52 = scmp.eq.s32.totalorder %s30, 1
      %p53 = por %p51, %p52
      %p55 = scmp.ne.s32.totalorder %s38, %s54
      %p56 = scmp.eq.s32.totalorder %s30, 0
      %p57 = por %p55, %p56
      %s58 = ssub.s32 %s24, %s31
      %p59 = scmp.eq.s32.totalorder %s58, 0
      %s61 = sadd.s32 %s60, 1
      %s62 = scalar_select %p59, %s60, %s61
      %p65 = pneg %p59
      %p66 = scmp.eq.s32.totalorder %s24, 1
      %p67 = por %p65, %p66
      %p68 = scmp.ne.s32.totalorder %s60, %s63
      %p69 = scmp.eq.s32.totalorder %s24, 0
      %p70 = por %p68, %p69
      %p71 = scmp.ne.s32.totalorder %s60, %s63
      %p72 = scmp.eq.s32.totalorder %s29, 1
      %p73 = por %p71, %p72
      %p74 = scmp.ne.s32.totalorder %s63, %s64
      %p75 = scmp.eq.s32.totalorder %s29, 0
      %p76 = por %p74, %p75
      %p77 = scmp.ne.s32.totalorder %s63, %s64
      %p78 = scmp.eq.s32.totalorder %s30, 1
      %p79 = por %p77, %p78
      %p81 = scmp.ne.s32.totalorder %s64, %s80
      %p82 = scmp.eq.s32.totalorder %s30, 0
      %p83 = por %p81, %p82
      %s84 = ssub.s32 %s24, %s31
      %p85 = scmp.eq.s32.totalorder %s84, 0
      %s87 = sadd.s32 %s86, 1
      %s88 = scalar_select %p85, %s86, %s87
      %p91 = pneg %p85
      %p92 = scmp.eq.s32.totalorder %s24, 1
      %p93 = por %p91, %p92
      %p94 = scmp.ne.s32.totalorder %s86, %s89
      %p95 = scmp.eq.s32.totalorder %s24, 0
      %p96 = por %p94, %p95
      %p97 = scmp.ne.s32.totalorder %s86, %s89
      %p98 = scmp.eq.s32.totalorder %s29, 1
      %p99 = por %p97, %p98
      %p100 = scmp.ne.s32.totalorder %s89, %s90
      %p101 = scmp.eq.s32.totalorder %s29, 0
      %p102 = por %p100, %p101
      %p103 = scmp.ne.s32.totalorder %s89, %s90
      %p104 = scmp.eq.s32.totalorder %s30, 1
      %p105 = por %p103, %p104
      %p107 = scmp.ne.s32.totalorder %s90, %s106
      %p108 = scmp.eq.s32.totalorder %s30, 0
      %p109 = por %p107, %p108
      %s110 = ssub.s32 %s24, %s31
      %p111 = scmp.eq.s32.totalorder %s110, 0
      %s113 = sadd.s32 %s112, 1
      %s114 = scalar_select %p111, %s112, %s113
      %p117 = pneg %p111
      %p118 = scmp.eq.s32.totalorder %s24, 1
      %p119 = por %p117, %p118
      %p120 = scmp.ne.s32.totalorder %s112, %s115
      %p121 = scmp.eq.s32.totalorder %s24, 0
      %p122 = por %p120, %p121
      %p123 = scmp.ne.s32.totalorder %s112, %s115
      %p124 = scmp.eq.s32.totalorder %s29, 1
      %p125 = por %p123, %p124
      %p126 = scmp.ne.s32.totalorder %s115, %s116
      %p127 = scmp.eq.s32.totalorder %s29, 0
      %p128 = por %p126, %p127
      %p129 = scmp.ne.s32.totalorder %s115, %s116
      %p130 = scmp.eq.s32.totalorder %s30, 1
      %p131 = por %p129, %p130
      %p133 = scmp.ne.s32.totalorder %s116, %s132
      %p134 = scmp.eq.s32.totalorder %s30, 0
      %p135 = por %p133, %p134
      %s136 = ssub.s32 %s24, %s31
      %p137 = scmp.eq.s32.totalorder %s136, 0
      %s139 = sadd.s32 %s138, 1
      %s140 = scalar_select %p137, %s138, %s139
      %p143 = pneg %p137
      %p144 = scmp.eq.s32.totalorder %s24, 1
      %p145 = por %p143, %p144
      %p146 = scmp.ne.s32.totalorder %s138, %s141
      %p147 = scmp.eq.s32.totalorder %s24, 0
      %p148 = por %p146, %p147
      %p149 = scmp.ne.s32.totalorder %s138, %s141
      %p150 = scmp.eq.s32.totalorder %s29, 1
      %p151 = por %p149, %p150
      %p152 = scmp.ne.s32.totalorder %s141, %s142
      %p153 = scmp.eq.s32.totalorder %s29, 0
      %p154 = por %p152, %p153
      %p155 = scmp.ne.s32.totalorder %s141, %s142
      %p156 = scmp.eq.s32.totalorder %s30, 1
      %p157 = por %p155, %p156
      %p159 = scmp.ne.s32.totalorder %s142, %s158
      %p160 = scmp.eq.s32.totalorder %s30, 0
      %p161 = por %p159, %p160
      %s162 = ssub.s32 %s24, %s31
      %p163 = scmp.eq.s32.totalorder %s162, 0
      %s165 = sadd.s32 %s164, 1
      %s166 = scalar_select %p163, %s164, %s165
      %p169 = pneg %p163
      %p170 = scmp.eq.s32.totalorder %s24, 1
      %p171 = por %p169, %p170
      %p172 = scmp.ne.s32.totalorder %s164, %s167
      %p173 = scmp.eq.s32.totalorder %s24, 0
      %p174 = por %p172, %p173
      %p175 = scmp.ne.s32.totalorder %s164, %s167
      %p176 = scmp.eq.s32.totalorder %s29, 1
      %p177 = por %p175, %p176
      %p178 = scmp.ne.s32.totalorder %s167, %s168
      %p179 = scmp.eq.s32.totalorder %s29, 0
      %p180 = por %p178, %p179
      %p181 = scmp.ne.s32.totalorder %s167, %s168
      %p182 = scmp.eq.s32.totalorder %s30, 1
      %p183 = por %p181, %p182
      %p185 = scmp.ne.s32.totalorder %s168, %s184
      %p186 = scmp.eq.s32.totalorder %s30, 0
      %p187 = por %p185, %p186
      %s189 = sadd.s32 %s188, 1
      %p192 = scmp.eq.s32.totalorder %s24, 1
      %p193 = scmp.ne.s32.totalorder %s188, %s190
      %p194 = scmp.eq.s32.totalorder %s24, 0
      %p195 = por %p193, %p194
      %p196 = scmp.ne.s32.totalorder %s188, %s190
      %p197 = scmp.eq.s32.totalorder %s29, 1
      %p198 = por %p196, %p197
      %p199 = scmp.ne.s32.totalorder %s190, %s191
      %p200 = scmp.eq.s32.totalorder %s29, 0
      %p201 = por %p199, %p200
      %p202 = scmp.ne.s32.totalorder %s190, %s191
      %p203 = scmp.eq.s32.totalorder %s30, 1
      %p204 = por %p202, %p203
      %p206 = scmp.ne.s32.totalorder %s191, %s205
      %p207 = scmp.eq.s32.totalorder %s30, 0
      %p208 = por %p206, %p207
      %s210 = sadd.s32 %s209, 1
      %p213 = scmp.eq.s32.totalorder %s24, 1
      %p214 = scmp.ne.s32.totalorder %s209, %s211
      %p215 = scmp.eq.s32.totalorder %s24, 0
      %p216 = por %p214, %p215
      %p217 = scmp.ne.s32.totalorder %s209, %s211
      %p218 = scmp.eq.s32.totalorder %s29, 1
      %p219 = por %p217, %p218
      %p220 = scmp.ne.s32.totalorder %s211, %s212
      %p221 = scmp.eq.s32.totalorder %s29, 0
      %p222 = por %p220, %p221
      %p223 = scmp.ne.s32.totalorder %s211, %s212
      %p224 = scmp.eq.s32.totalorder %s30, 1
      %p225 = por %p223, %p224
      %p227 = scmp.ne.s32.totalorder %s212, %s226
      %p228 = scmp.eq.s32.totalorder %s30, 0
      %p229 = por %p227, %p228
      %s231 = sadd.s32 %s230, 1
      %p234 = scmp.eq.s32.totalorder %s24, 1
      %p235 = scmp.ne.s32.totalorder %s230, %s232
      %p236 = scmp.eq.s32.totalorder %s24, 0
      %p237 = por %p235, %p236
      %p238 = scmp.ne.s32.totalorder %s230, %s232
      %p239 = scmp.eq.s32.totalorder %s29, 1
      %p240 = por %p238, %p239
      %p241 = scmp.ne.s32.totalorder %s232, %s233
      %p242 = scmp.eq.s32.totalorder %s29, 0
      %p243 = por %p241, %p242
      %p244 = scmp.ne.s32.totalorder %s232, %s233
      %p245 = scmp.eq.s32.totalorder %s30, 1
      %p246 = por %p244, %p245
      %p248 = scmp.ne.s32.totalorder %s233, %s247
      %p249 = scmp.eq.s32.totalorder %s30, 0
      %p250 = por %p248, %p249
      %s252 = sadd.s32 %s251, 1
      %p255 = scmp.eq.s32.totalorder %s24, 1
      %p256 = scmp.ne.s32.totalorder %s251, %s253
      %p257 = scmp.eq.s32.totalorder %s24, 0
      %p258 = por %p256, %p257
      %p259 = scmp.ne.s32.totalorder %s251, %s253
      %p260 = scmp.eq.s32.totalorder %s29, 1
      %p261 = por %p259, %p260
      %p262 = scmp.ne.s32.totalorder %s253, %s254
      %p263 = scmp.eq.s32.totalorder %s29, 0
      %p264 = por %p262, %p263
      %p265 = scmp.ne.s32.totalorder %s253, %s254
      %p266 = scmp.eq.s32.totalorder %s30, 1
      %p267 = por %p265, %p266
      %p269 = scmp.ne.s32.totalorder %s254, %s268
      %p270 = scmp.eq.s32.totalorder %s30, 0
      %p271 = por %p269, %p270
      %s273 = sadd.s32 %s272, 1
      %p276 = scmp.eq.s32.totalorder %s24, 1
      %p277 = scmp.ne.s32.totalorder %s272, %s274
      %p278 = scmp.eq.s32.totalorder %s24, 0
      %p279 = por %p277, %p278
      %p280 = scmp.ne.s32.totalorder %s272, %s274
      %p281 = scmp.eq.s32.totalorder %s29, 1
      %p282 = por %p280, %p281
      %p283 = scmp.ne.s32.totalorder %s274, %s275
      %p284 = scmp.eq.s32.totalorder %s29, 0
      %p285 = por %p283, %p284
      %p286 = scmp.ne.s32.totalorder %s274, %s275
      %p287 = scmp.eq.s32.totalorder %s30, 1
      %p288 = por %p286, %p287
      %p290 = scmp.ne.s32.totalorder %s275, %s289
      %p291 = scmp.eq.s32.totalorder %s30, 0
      %p292 = por %p290, %p291
      %s294 = sadd.s32 %s293, 1
      %p297 = scmp.eq.s32.totalorder %s24, 1
      %p298 = scmp.ne.s32.totalorder %s293, %s295
      %p299 = scmp.eq.s32.totalorder %s24, 0
      %p300 = por %p298, %p299
      %p301 = scmp.ne.s32.totalorder %s293, %s295
      %p302 = scmp.eq.s32.totalorder %s29, 1
      %p303 = por %p301, %p302
      %p304 = scmp.ne.s32.totalorder %s295, %s296
      %p305 = scmp.eq.s32.totalorder %s29, 0
      %p306 = por %p304, %p305
      %p307 = scmp.ne.s32.totalorder %s295, %s296
      %p308 = scmp.eq.s32.totalorder %s30, 1
      %p309 = por %p307, %p308
      %p311 = scmp.ne.s32.totalorder %s296, %s310
      %p312 = scmp.eq.s32.totalorder %s30, 0
      %p313 = por %p311, %p312
      %s314 = ssub.s32 %s24, %s31
      %p315 = scmp.eq.s32.totalorder %s314, 0
      %s317 = sadd.s32 %s316, 1
      %s318 = scalar_select %p315, %s316, %s317
      %p321 = pneg %p315
      %p322 = scmp.eq.s32.totalorder %s24, 1
      %p323 = por %p321, %p322
      %p324 = scmp.ne.s32.totalorder %s316, %s319
      %p325 = scmp.eq.s32.totalorder %s24, 0
      %p326 = por %p324, %p325
      %p327 = scmp.ne.s32.totalorder %s316, %s319
      %p328 = scmp.eq.s32.totalorder %s29, 1
      %p329 = por %p327, %p328
      %p330 = scmp.ne.s32.totalorder %s319, %s320
      %p331 = scmp.eq.s32.totalorder %s29, 0
      %p332 = por %p330, %p331
      %p333 = scmp.ne.s32.totalorder %s319, %s320
      %p334 = scmp.eq.s32.totalorder %s30, 1
      %p335 = por %p333, %p334
      %p337 = scmp.ne.s32.totalorder %s320, %s336
      %p338 = scmp.eq.s32.totalorder %s30, 0
      %p339 = por %p337, %p338
      %p340 = scmp.le.s32.totalorder 1, %s24
      %p341 = scmp.lt.s32.totalorder %s24, 3
      %p342 = pnand %p340, %p341
      %p343 = pneg %p342
      // Predicated region
      $region9: #{tpu_custom_call.1} parent=5 // pred_check
        _
      $region10: #{tpu_custom_call.1} parent=5 // pred_check_branch
        %345 = sbr.rel (%p342) target = $region12
      $region11: #{tpu_custom_call.1} parent=5 // pred_region
        %s346 = ssub.s32 %s24, 1
        // Predicated region
        $region13: #{tpu_custom_call.1} parent=11 // pred_check
          %p347 = pneg %p201
        $region14: #{tpu_custom_call.1} parent=11 // pred_check_branch
          %349 = sbr.rel (%p347) target = $region16
        $region15: #{tpu_custom_call.1} parent=11 // pred_region
          %s351 = ssub.s32 256, 256
          %352 = vsyncadd [#allocation3], %s351
          %s353 = sshll.u32 [#allocation2], 4
          %s354 = int_to_ptr.vmem [resolvable:$true] %s353
          %359 = dma.hbm_to_vmem [thread:$0]  %s6, 256, %s354, [#allocation3], 64, 64, 4
        $region16: #{tpu_custom_call.1} parent=11 // pred_fallthru
          _
        // Predicated region
        $region17: #{tpu_custom_call.1} parent=11 // pred_check
          %p360 = pneg %p222
        $region18: #{tpu_custom_call.1} parent=11 // pred_check_branch
          %362 = sbr.rel (%p360) target = $region20
        $region19: #{tpu_custom_call.1} parent=11 // pred_region
          %s364 = ssub.s32 256, 256
          %365 = vsyncadd [#allocation7], %s364
          %s366 = sshll.u32 [#allocation6], 4
          %s367 = int_to_ptr.vmem [resolvable:$true] %s366
          %372 = dma.hbm_to_vmem [thread:$0]  %s7, 256, %s367, [#allocation7], 64, 64, 4
        $region20: #{tpu_custom_call.1} parent=11 // pred_fallthru
          _
        // Predicated region
        $region21: #{tpu_custom_call.1} parent=11 // pred_check
          %p373 = pneg %p243
        $region22: #{tpu_custom_call.1} parent=11 // pred_check_branch
          %375 = sbr.rel (%p373) target = $region24
        $region23: #{tpu_custom_call.1} parent=11 // pred_region
          _
        $region24: #{tpu_custom_call.1} parent=11 // pred_fallthru
          _
        // Predicated region
        $region25: #{tpu_custom_call.1} parent=11 // pred_check
          %p376 = pneg %p264
        $region26: #{tpu_custom_call.1} parent=11 // pred_check_branch
          %378 = sbr.rel (%p376) target = $region28
        $region27: #{tpu_custom_call.1} parent=11 // pred_region
          %s380 = ssub.s32 16, 16
          %381 = vsyncadd [#allocation7], %s380
          %s383 = sshll.u32 [#allocation8], 4
          %s384 = int_to_ptr.vmem [resolvable:$true] %s383
          %386 = dma.hbm_to_vmem [thread:$0]  %s9, 16, %s384, [#allocation7]
        $region28: #{tpu_custom_call.1} parent=11 // pred_fallthru
          _
        // Predicated region
        $region29: #{tpu_custom_call.1} parent=11 // pred_check
          %p387 = pneg %p285
        $region30: #{tpu_custom_call.1} parent=11 // pred_check_branch
          %389 = sbr.rel (%p387) target = $region32
        $region31: #{tpu_custom_call.1} parent=11 // pred_region
          _
        $region32: #{tpu_custom_call.1} parent=11 // pred_fallthru
          _
        // Predicated region
        $region33: #{tpu_custom_call.1} parent=11 // pred_check
          %p390 = pneg %p306
        $region34: #{tpu_custom_call.1} parent=11 // pred_check_branch
          %392 = sbr.rel (%p390) target = $region36
        $region35: #{tpu_custom_call.1} parent=11 // pred_region
          %s394 = ssub.s32 16, 16
          %395 = vsyncadd [#allocation5], %s394
          %s397 = sshll.u32 %s11, 4
          %s398 = int_to_ptr.vmem [resolvable:$true] %s397
          %400 = dma.vmem_to_smem %s398, 16, [#allocation9], [#allocation5]
        $region36: #{tpu_custom_call.1} parent=11 // pred_fallthru
          _
      $region12: #{tpu_custom_call.1} parent=5 // pred_fallthru
        _
      %p401 = scmp.lt.s32.totalorder %s24, 2
      // Predicated region
      $region37: #{tpu_custom_call.1} parent=5 // pred_check
        %p402 = pneg %p401
      $region38: #{tpu_custom_call.1} parent=5 // pred_check_branch
        %404 = sbr.rel (%p402) target = $region40
      $region39: #{tpu_custom_call.1} parent=5 // pred_region
        // Predicated region
        $region41: #{tpu_custom_call.1} parent=39 // pred_check
          %p405 = pneg %p44
        $region42: #{tpu_custom_call.1} parent=39 // pred_check_branch
          %407 = sbr.rel (%p405) target = $region44
        $region43: #{tpu_custom_call.1} parent=39 // pred_region
          %s408 = smul.u32 2, %s24
          %p409 = scmp.lt.s32.totalorder %s408, 3
          %s410 = scalar_select %p409, %s408, 3
          %s411 = smul.addr %s410, 4
          %s412 = scalar_lea.vmem %s0, %s411
          %s413 = smul.u32 2, %s24
        $region44: #{tpu_custom_call.1} parent=39 // pred_fallthru
          _
        // Predicated region
        $region45: #{tpu_custom_call.1} parent=39 // pred_check
          %p414 = pneg %p70
        $region46: #{tpu_custom_call.1} parent=39 // pred_check_branch
          %416 = sbr.rel (%p414) target = $region48
        $region47: #{tpu_custom_call.1} parent=39 // pred_region
          %s417 = smul.u32 2, %s24
          %p418 = scmp.lt.s32.totalorder %s417, 3
          %s419 = scalar_select %p418, %s417, 3
          %s420 = smul.addr %s419, 4
          %s421 = scalar_lea.vmem %s1, %s420
          %s422 = smul.u32 2, %s24
        $region48: #{tpu_custom_call.1} parent=39 // pred_fallthru
          _
        // Predicated region
        $region49: #{tpu_custom_call.1} parent=39 // pred_check
          %p423 = pneg %p96
        $region50: #{tpu_custom_call.1} parent=39 // pred_check_branch
          %425 = sbr.rel (%p423) target = $region52
        $region51: #{tpu_custom_call.1} parent=39 // pred_region
          %s426 = smul.u32 2, %s24
          %p427 = scmp.lt.s32.totalorder %s426, 3
          %s428 = scalar_select %p427, %s426, 3
          %s429 = smul.addr %s428, 2
          %s430 = smul.addr %s429, 4
          %s431 = scalar_lea.vmem %s2, %s430
          %s432 = smul.u32 2, %s24
        $region52: #{tpu_custom_call.1} parent=39 // pred_fallthru
          _
        // Predicated region
        $region53: #{tpu_custom_call.1} parent=39 // pred_check
          %p433 = pneg %p122
        $region54: #{tpu_custom_call.1} parent=39 // pred_check_branch
          %435 = sbr.rel (%p433) target = $region56
        $region55: #{tpu_custom_call.1} parent=39 // pred_region
          %s436 = smul.u32 2, %s24
          %p437 = scmp.lt.s32.totalorder %s436, 3
          %s438 = scalar_select %p437, %s436, 3
          %s439 = smul.addr %s438, 2
          %s440 = smul.addr %s439, 4
          %s441 = scalar_lea.vmem %s3, %s440
          %s442 = smul.u32 2, %s24
        $region56: #{tpu_custom_call.1} parent=39 // pred_fallthru
          _
        // Predicated region
        $region57: #{tpu_custom_call.1} parent=39 // pred_check
          %p443 = pneg %p148
        $region58: #{tpu_custom_call.1} parent=39 // pred_check_branch
          %445 = sbr.rel (%p443) target = $region60
        $region59: #{tpu_custom_call.1} parent=39 // pred_region
          %s446 = smul.u32 2, %s24
          %p447 = scmp.lt.s32.totalorder %s446, 3
          %s448 = scalar_select %p447, %s446, 3
          %s449 = smul.addr %s448, 8
          %s450 = scalar_lea.vmem %s4, %s449
          %s451 = smul.u32 2, %s24
        $region60: #{tpu_custom_call.1} parent=39 // pred_fallthru
          _
        // Predicated region
        $region61: #{tpu_custom_call.1} parent=39 // pred_check
          %p452 = pneg %p174
        $region62: #{tpu_custom_call.1} parent=39 // pred_check_branch
          %454 = sbr.rel (%p452) target = $region64
        $region63: #{tpu_custom_call.1} parent=39 // pred_region
          %s455 = smul.u32 2, %s24
          %p456 = scmp.lt.s32.totalorder %s455, 3
          %s457 = scalar_select %p456, %s455, 3
          %s458 = smul.addr %s457, 8
          %s459 = scalar_lea.vmem %s5, %s458
          %s460 = smul.u32 2, %s24
        $region64: #{tpu_custom_call.1} parent=39 // pred_fallthru
          _
      $region40: #{tpu_custom_call.1} parent=5 // pred_fallthru
        _
      %p461 = scmp.le.s32.totalorder 1, %s24
      %p462 = scmp.lt.s32.totalorder %s24, 3
      %p463 = pnand %p461, %p462
      %p464 = pneg %p463
      // Predicated region
      $region65: #{tpu_custom_call.1} parent=5 // pred_check
        _
      $region66: #{tpu_custom_call.1} parent=5 // pred_check_branch
        %466 = sbr.rel (%p463) target = $region68
      $region67: #{tpu_custom_call.1} parent=5 // pred_region
        %s467 = ssub.s32 %s24, 1
        // Predicated region
        $region69: #{tpu_custom_call.1} parent=67 // pred_check
          %p468 = pneg %p201
        $region70: #{tpu_custom_call.1} parent=67 // pred_check_branch
          %470 = sbr.rel (%p468) target = $region72
        $region71: #{tpu_custom_call.1} parent=67 // pred_region
          %471 = dma.done [#allocation3], 256
        $region72: #{tpu_custom_call.1} parent=67 // pred_fallthru
          _
        // Predicated region
        $region73: #{tpu_custom_call.1} parent=67 // pred_check
          %p472 = pneg %p222
        $region74: #{tpu_custom_call.1} parent=67 // pred_check_branch
          %474 = sbr.rel (%p472) target = $region76
        $region75: #{tpu_custom_call.1} parent=67 // pred_region
          %475 = dma.done [#allocation7], 256
        $region76: #{tpu_custom_call.1} parent=67 // pred_fallthru
          _
        // Predicated region
        $region77: #{tpu_custom_call.1} parent=67 // pred_check
          %p476 = pneg %p264
        $region78: #{tpu_custom_call.1} parent=67 // pred_check_branch
          %478 = sbr.rel (%p476) target = $region80
        $region79: #{tpu_custom_call.1} parent=67 // pred_region
          %479 = dma.done [#allocation7], 16
        $region80: #{tpu_custom_call.1} parent=67 // pred_fallthru
          _
        // Predicated region
        $region81: #{tpu_custom_call.1} parent=67 // pred_check
          %p480 = pneg %p306
        $region82: #{tpu_custom_call.1} parent=67 // pred_check_branch
          %482 = sbr.rel (%p480) target = $region84
        $region83: #{tpu_custom_call.1} parent=67 // pred_region
          %483 = dma.done [#allocation5], 16
        $region84: #{tpu_custom_call.1} parent=67 // pred_fallthru
          _
        %484 = sfence
        %s485 = smul.u32 2, %s29
        %p486 = scmp.lt.s32.totalorder %s485, 3
        %s487 = scalar_select %p486, %s485, 3
        %s488 = smul.addr %s487, 4
        %s489 = scalar_lea.vmem %s0, %s488
        %p490 = pneg %p50
        %p491 = pneg %p47
        %s492 = smul.u32 2, %s29
        %p493 = scmp.lt.s32.totalorder %s492, 3
        %s494 = scalar_select %p493, %s492, 3
        %s495 = smul.addr %s494, 4
        %s496 = scalar_lea.vmem %s1, %s495
        %p497 = pneg %p76
        %p498 = pneg %p73
        %s499 = smul.u32 2, %s29
        %p500 = scmp.lt.s32.totalorder %s499, 3
        %s501 = scalar_select %p500, %s499, 3
        %s502 = smul.addr %s501, 2
        %s503 = smul.addr %s502, 4
        %s504 = scalar_lea.vmem %s2, %s503
        %p505 = pneg %p102
        %p506 = pneg %p99
        %s507 = smul.u32 2, %s29
        %p508 = scmp.lt.s32.totalorder %s507, 3
        %s509 = scalar_select %p508, %s507, 3
        %s510 = smul.addr %s509, 2
        %s511 = smul.addr %s510, 4
        %s512 = scalar_lea.vmem %s3, %s511
        %p513 = pneg %p128
        %p514 = pneg %p125
        %s515 = smul.u32 2, %s29
        %p516 = scmp.lt.s32.totalorder %s515, 3
        %s517 = scalar_select %p516, %s515, 3
        %s518 = smul.addr %s517, 8
        %s519 = scalar_lea.vmem %s4, %s518
        %p520 = pneg %p154
        %p521 = pneg %p151
        %s522 = smul.u32 2, %s29
        %p523 = scmp.lt.s32.totalorder %s522, 3
        %s524 = scalar_select %p523, %s522, 3
        %s525 = smul.addr %s524, 8
        %s526 = scalar_lea.vmem %s5, %s525
        %p527 = pneg %p180
        %p528 = pneg %p177
        %p529 = pneg %p201
        %p530 = pneg %p198
        %p531 = pneg %p222
        %p532 = pneg %p219
        %p533 = pneg %p243
        %p534 = pneg %p240
        %p535 = pneg %p264
        %p536 = pneg %p261
        %p537 = pneg %p285
        %p538 = pneg %p282
        %p539 = pneg %p306
        %p540 = pneg %p303
        %p541 = pneg %p332
        %p542 = pneg %p329
        %s543 = sand.u32 %s319, 1
        %s544 = scalar_lea.sflag [#allocation4], %s543
        %s545 = sand.u32 %s319, 1
        %s546 = smul.addr %s545, 16
        %s547 = scalar_lea.vmem [#allocation10], %s546
        %s548 = smul.u32 2, %s29
        %p549 = scmp.lt.s32.totalorder %s548, 3
        %s550 = scalar_select %p549, %s548, 3
        %s551 = smul.addr %s550, 4
        %s552 = scalar_lea.vmem %s0, %s551
        %s553 = smul.u32 2, %s29
        %s554 = smul.u32 2, %s29
        %p555 = scmp.lt.s32.totalorder %s554, 3
        %s556 = scalar_select %p555, %s554, 3
        %s557 = smul.addr %s556, 4
        %s558 = scalar_lea.vmem %s1, %s557
        %s559 = smul.u32 2, %s29
        %s560 = smul.u32 2, %s29
        %p561 = scmp.lt.s32.totalorder %s560, 3
        %s562 = scalar_select %p561, %s560, 3
        %s563 = smul.addr %s562, 2
        %s564 = smul.addr %s563, 4
        %s565 = scalar_lea.vmem %s2, %s564
        %s566 = smul.u32 2, %s29
        %s567 = smul.u32 2, %s29
        %p568 = scmp.lt.s32.totalorder %s567, 3
        %s569 = scalar_select %p568, %s567, 3
        %s570 = smul.addr %s569, 2
        %s571 = smul.addr %s570, 4
        %s572 = scalar_lea.vmem %s3, %s571
        %s573 = smul.u32 2, %s29
        %s574 = smul.u32 2, %s29
        %p575 = scmp.lt.s32.totalorder %s574, 3
        %s576 = scalar_select %p575, %s574, 3
        %s577 = smul.addr %s576, 8
        %s578 = scalar_lea.vmem %s4, %s577
        %s579 = smul.u32 2, %s29
        %s580 = smul.u32 2, %s29
        %p581 = scmp.lt.s32.totalorder %s580, 3
        %s582 = scalar_select %p581, %s580, 3
        %s583 = smul.addr %s582, 8
        %s584 = scalar_lea.vmem %s5, %s583
        %s585 = smul.u32 2, %s29
        %s586 = smul.u32 2, %s29
        %v588 = vld [vmem:[%s552] sm:$0xf]
        %v589 = vld [vmem:[%s552 + $0x4] sm:$0xf]
        %v590 = vld [vmem:[#allocation2] sm:$0xf]
        %v591 = vld [vmem:[#allocation2 + $0x4] sm:$0xf]
        %v592 = vld [vmem:[#allocation2 + $0x8] sm:$0xf]
        %v593 = vld [vmem:[#allocation2 + $0xc] sm:$0xf]
        %v596 = vunpack.c.l.b16 %v588
        %v597 = vunpack.c.l.b16 %v589
        %v598 = vpack.c.b16 %v597, %v596
        %v603 = vunpack.c.l.b16 %v590
        %v604 = vunpack.c.l.b16 %v591
        %v605 = vunpack.c.l.b16 %v592
        %v606 = vunpack.c.l.b16 %v593
        %v607 = vpack.c.b16 %v604, %v603
        %v608 = vpack.c.b16 %v606, %v605
        %vm611 = vcmask 261120
        %v613 = vsel %vm611, %v598, 0
        %615 = vmatprep.subr.bf16.mxu0 0
        %616 = vmatpush1.bf16.msra.mxu0 0
        %617 = vmatprep.subr.bf16.mxu0 0
        %618 = vmatpush1.bf16.msra.mxu0 0
        %619 = vmatprep.subr.bf16.mxu0 0
        %620 = vmatpush1.bf16.msra.mxu0 0
        %621 = vmatprep.subr.bf16.mxu0 0
        %622 = vmatpush1.bf16.msra.mxu0 0
        %623 = vmatprep.subr.bf16.mxu0 0
        %624 = vmatpush1.bf16.msra.mxu0 0
        %625 = vmatprep.subr.bf16.mxu0 0
        %626 = vmatpush1.bf16.msra.mxu0 0
        %627 = vmatprep.subr.bf16.mxu0 0
        %628 = vmatpush1.bf16.msra.mxu0 %v608
        %629 = vmatprep.subr.bf16.mxu0 0
        %630 = vmatpush1.bf16.msra.mxu0 %v607
        %631 = vmatprep.subr.bf16.mxu0 0
        %632 = vmatpush2.bf16.msra.mxu0 0
        %633 = vmatprep.subr.bf16.mxu0 0
        %634 = vmatpush2.bf16.msra.mxu0 0
        %635 = vmatprep.subr.bf16.mxu0 0
        %636 = vmatpush2.bf16.msra.mxu0 0
        %637 = vmatprep.subr.bf16.mxu0 0
        %638 = vmatpush2.bf16.msra.mxu0 0
        %639 = vmatprep.subr.bf16.mxu0 0
        %640 = vmatpush2.bf16.msra.mxu0 0
        %641 = vmatprep.subr.bf16.mxu0 0
        %642 = vmatpush2.bf16.msra.mxu0 0
        %643 = vmatprep.subr.bf16.mxu0 0
        %644 = vmatpush2.bf16.msra.mxu0 0
        %645 = vmatprep.subr.bf16.mxu0 0
        %646 = vmatpush2.bf16.msra.mxu0 0
        %647 = vmatprep.mubr.bf16.mxu0 0
        %648 = vmatmul.mubr.bf16.gmra.mxu0 %v613
        %v649 = vpop.f32.mrf.mxu0
        %v650 = vadd.f32 0.0, %v649
        %v651 = vpop.f32.mrf.mxu0
        %v652 = vpop.f32.mrf.mxu0
        %v653 = vadd.f32 0.0, %v652
        %v654 = vpop.f32.mrf.mxu0
        %655 = vdwg.mxu0
        %v656 = vld [vmem:[%s558] sm:$0xf]
        %v657 = vld [vmem:[%s558 + $0x4] sm:$0xf]
        %v660 = vunpack.c.l.b16 %v656
        %v661 = vunpack.c.l.b16 %v657
        %v662 = vpack.c.b16 %v661, %v660
        %v664 = vsel %vm611, %v662, 0
        %666 = vmatprep.subr.bf16.mxu0 0
        %667 = vmatpush1.bf16.msra.mxu0 0
        %668 = vmatprep.subr.bf16.mxu0 0
        %669 = vmatpush1.bf16.msra.mxu0 0
        %670 = vmatprep.subr.bf16.mxu0 0
        %671 = vmatpush1.bf16.msra.mxu0 0
        %672 = vmatprep.subr.bf16.mxu0 0
        %673 = vmatpush1.bf16.msra.mxu0 0
        %674 = vmatprep.subr.bf16.mxu0 0
        %675 = vmatpush1.bf16.msra.mxu0 0
        %676 = vmatprep.subr.bf16.mxu0 0
        %677 = vmatpush1.bf16.msra.mxu0 0
        %678 = vmatprep.subr.bf16.mxu0 0
        %679 = vmatpush1.bf16.msra.mxu0 %v608
        %680 = vmatprep.subr.bf16.mxu0 0
        %681 = vmatpush1.bf16.msra.mxu0 %v607
        %682 = vmatprep.subr.bf16.mxu0 0
        %683 = vmatpush2.bf16.msra.mxu0 0
        %684 = vmatprep.subr.bf16.mxu0 0
        %685 = vmatpush2.bf16.msra.mxu0 0
        %686 = vmatprep.subr.bf16.mxu0 0
        %687 = vmatpush2.bf16.msra.mxu0 0
        %688 = vmatprep.subr.bf16.mxu0 0
        %689 = vmatpush2.bf16.msra.mxu0 0
        %690 = vmatprep.subr.bf16.mxu0 0
        %691 = vmatpush2.bf16.msra.mxu0 0
        %692 = vmatprep.subr.bf16.mxu0 0
        %693 = vmatpush2.bf16.msra.mxu0 0
        %694 = vmatprep.subr.bf16.mxu0 0
        %695 = vmatpush2.bf16.msra.mxu0 0
        %696 = vmatprep.subr.bf16.mxu0 0
        %697 = vmatpush2.bf16.msra.mxu0 0
        %698 = vmatprep.mubr.bf16.mxu0 0
        %699 = vmatmul.mubr.bf16.gmra.mxu0 %v664
        %v700 = vpop.f32.mrf.mxu0
        %v701 = vadd.f32 0.0, %v700
        %v702 = vpop.f32.mrf.mxu0
        %v703 = vpop.f32.mrf.mxu0
        %v704 = vadd.f32 0.0, %v703
        %v705 = vpop.f32.mrf.mxu0
        %706 = vdwg.mxu0
        %v707 = vld [vmem:[#allocation6] sm:$0xf]
        %v708 = vld [vmem:[#allocation6 + $0x4] sm:$0xf]
        %v709 = vld [vmem:[#allocation6 + $0x8] sm:$0xf]
        %v710 = vld [vmem:[#allocation6 + $0xc] sm:$0xf]
        %v711 = vld [vmem:[#allocation8] sm:$0x1]
        %v713 = vlaneseq
        %v714 = vshrl.u32 %v713, 7
        %v715 = vsub.s32 0, %v714
        %v716 = vrot.slane %v711, %v715
        %v722 = vunpack.c.l.b16 %v707
        %v723 = vunpack.c.l.b16 %v708
        %v724 = vunpack.c.l.b16 %v709
        %v725 = vunpack.c.l.b16 %v710
        %v726 = vpack.c.b16 %v723, %v722
        %v727 = vpack.c.b16 %v725, %v724
        %730 = vmatprep.subr.bf16.mxu0 0
        %731 = vmatpush1.bf16.msra.mxu0 0
        %732 = vmatprep.subr.bf16.mxu0 0
        %733 = vmatpush1.bf16.msra.mxu0 0
        %734 = vmatprep.subr.bf16.mxu0 0
        %735 = vmatpush1.bf16.msra.mxu0 0
        %736 = vmatprep.subr.bf16.mxu0 0
        %737 = vmatpush1.bf16.msra.mxu0 0
        %738 = vmatprep.subr.bf16.mxu0 0
        %739 = vmatpush1.bf16.msra.mxu0 0
        %740 = vmatprep.subr.bf16.mxu0 0
        %741 = vmatpush1.bf16.msra.mxu0 0
        %742 = vmatprep.subr.bf16.mxu0 0
        %743 = vmatpush1.bf16.msra.mxu0 %v727
        %744 = vmatprep.subr.bf16.mxu0 0
        %745 = vmatpush1.bf16.msra.mxu0 %v726
        %746 = vmatprep.subr.bf16.mxu0 0
        %747 = vmatpush2.bf16.msra.mxu0 0
        %748 = vmatprep.subr.bf16.mxu0 0
        %749 = vmatpush2.bf16.msra.mxu0 0
        %750 = vmatprep.subr.bf16.mxu0 0
        %751 = vmatpush2.bf16.msra.mxu0 0
        %752 = vmatprep.subr.bf16.mxu0 0
        %753 = vmatpush2.bf16.msra.mxu0 0
        %754 = vmatprep.subr.bf16.mxu0 0
        %755 = vmatpush2.bf16.msra.mxu0 0
        %756 = vmatprep.subr.bf16.mxu0 0
        %757 = vmatpush2.bf16.msra.mxu0 0
        %758 = vmatprep.subr.bf16.mxu0 0
        %759 = vmatpush2.bf16.msra.mxu0 0
        %760 = vmatprep.subr.bf16.mxu0 0
        %761 = vmatpush2.bf16.msra.mxu0 0
        %762 = vmatprep.mubr.bf16.mxu0 0
        %763 = vmatmul.mubr.bf16.gmra.mxu0 %v613
        %v764 = vpop.f32.mrf.mxu0
        %v765 = vadd.f32 %v716, %v764
        %v766 = vpop.f32.mrf.mxu0
        %v767 = vpop.f32.mrf.mxu0
        %v768 = vadd.f32 %v716, %v767
        %v769 = vpop.f32.mrf.mxu0
        %770 = vdwg.mxu0
        %771 = vmatprep.subr.bf16.mxu0 0
        %772 = vmatpush1.bf16.msra.mxu0 0
        %773 = vmatprep.subr.bf16.mxu0 0
        %774 = vmatpush1.bf16.msra.mxu0 0
        %775 = vmatprep.subr.bf16.mxu0 0
        %776 = vmatpush1.bf16.msra.mxu0 0
        %777 = vmatprep.subr.bf16.mxu0 0
        %778 = vmatpush1.bf16.msra.mxu0 0
        %779 = vmatprep.subr.bf16.mxu0 0
        %780 = vmatpush1.bf16.msra.mxu0 0
        %781 = vmatprep.subr.bf16.mxu0 0
        %782 = vmatpush1.bf16.msra.mxu0 0
        %783 = vmatprep.subr.bf16.mxu0 0
        %784 = vmatpush1.bf16.msra.mxu0 %v727
        %785 = vmatprep.subr.bf16.mxu0 0
        %786 = vmatpush1.bf16.msra.mxu0 %v726
        %787 = vmatprep.subr.bf16.mxu0 0
        %788 = vmatpush2.bf16.msra.mxu0 0
        %789 = vmatprep.subr.bf16.mxu0 0
        %790 = vmatpush2.bf16.msra.mxu0 0
        %791 = vmatprep.subr.bf16.mxu0 0
        %792 = vmatpush2.bf16.msra.mxu0 0
        %793 = vmatprep.subr.bf16.mxu0 0
        %794 = vmatpush2.bf16.msra.mxu0 0
        %795 = vmatprep.subr.bf16.mxu0 0
        %796 = vmatpush2.bf16.msra.mxu0 0
        %797 = vmatprep.subr.bf16.mxu0 0
        %798 = vmatpush2.bf16.msra.mxu0 0
        %799 = vmatprep.subr.bf16.mxu0 0
        %800 = vmatpush2.bf16.msra.mxu0 0
        %801 = vmatprep.subr.bf16.mxu0 0
        %802 = vmatpush2.bf16.msra.mxu0 0
        %803 = vmatprep.mubr.bf16.mxu0 0
        %804 = vmatmul.mubr.bf16.gmra.mxu0 %v664
        %v805 = vpop.f32.mrf.mxu0
        %v806 = vadd.f32 %v716, %v805
        %v807 = vpop.f32.mrf.mxu0
        %v808 = vpop.f32.mrf.mxu0
        %v809 = vadd.f32 %v716, %v808
        %v810 = vpop.f32.mrf.mxu0
        %811 = vdwg.mxu0
        %v812 = vld [vmem:[%s565] sm:$0xff]
        %v813 = vld [vmem:[%s565 + $0x8] sm:$0xff]
        %v814 = vld [vmem:[%s8] sm:$0xf]
        %v815 = vld [vmem:[%s8 + $0x4] sm:$0xf]
        %v816 = vld [vmem:[%s8 + $0x8] sm:$0xf]
        %v817 = vld [vmem:[%s8 + $0xc] sm:$0xf]
        %v818 = vld [vmem:[%s8 + $0x10] sm:$0xf]
        %v819 = vld [vmem:[%s8 + $0x14] sm:$0xf]
        %v820 = vld [vmem:[%s8 + $0x18] sm:$0xf]
        %v821 = vld [vmem:[%s8 + $0x1c] sm:$0xf]
        %v822 = vld [vmem:[%s8 + $0x20] sm:$0xf]
        %v823 = vld [vmem:[%s8 + $0x24] sm:$0xf]
        %v824 = vld [vmem:[%s8 + $0x28] sm:$0xf]
        %v825 = vld [vmem:[%s8 + $0x2c] sm:$0xf]
        %v826 = vld [vmem:[%s8 + $0x30] sm:$0xf]
        %v827 = vld [vmem:[%s8 + $0x34] sm:$0xf]
        %v828 = vld [vmem:[%s8 + $0x38] sm:$0xf]
        %v829 = vld [vmem:[%s8 + $0x3c] sm:$0xf]
        %v830 = vld [vmem:[%s8 + $0x40] sm:$0xf]
        %v831 = vld [vmem:[%s8 + $0x44] sm:$0xf]
        %v832 = vld [vmem:[%s8 + $0x48] sm:$0xf]
        %v833 = vld [vmem:[%s8 + $0x4c] sm:$0xf]
        %v834 = vld [vmem:[%s8 + $0x50] sm:$0xf]
        %v835 = vld [vmem:[%s8 + $0x54] sm:$0xf]
        %v836 = vld [vmem:[%s8 + $0x58] sm:$0xf]
        %v837 = vld [vmem:[%s8 + $0x5c] sm:$0xf]
        %v838 = vld [vmem:[%s8 + $0x60] sm:$0xf]
        %v839 = vld [vmem:[%s8 + $0x64] sm:$0xf]
        %v840 = vld [vmem:[%s8 + $0x68] sm:$0xf]
        %v841 = vld [vmem:[%s8 + $0x6c] sm:$0xf]
        %v842 = vld [vmem:[%s8 + $0x70] sm:$0xf]
        %v843 = vld [vmem:[%s8 + $0x74] sm:$0xf]
        %v844 = vld [vmem:[%s8 + $0x78] sm:$0xf]
        %v845 = vld [vmem:[%s8 + $0x7c] sm:$0xf]
        %v848 = vunpack.c.l.b16 %v812
        %v849 = vunpack.c.h.b16 %v812
        %v850 = vunpack.c.l.b16 %v813
        %v851 = vunpack.c.h.b16 %v813
        %v852 = vpack.c.b16 %v850, %v848
        %v853 = vpack.c.b16 %v851, %v849
        %v888 = vunpack.c.l.b16 %v814
        %v889 = vunpack.c.l.b16 %v815
        %v890 = vunpack.c.l.b16 %v816
        %v891 = vunpack.c.l.b16 %v817
        %v892 = vunpack.c.l.b16 %v818
        %v893 = vunpack.c.l.b16 %v819
        %v894 = vunpack.c.l.b16 %v820
        %v895 = vunpack.c.l.b16 %v821
        %v896 = vunpack.c.l.b16 %v822
        %v897 = vunpack.c.l.b16 %v823
        %v898 = vunpack.c.l.b16 %v824
        %v899 = vunpack.c.l.b16 %v825
        %v900 = vunpack.c.l.b16 %v826
        %v901 = vunpack.c.l.b16 %v827
        %v902 = vunpack.c.l.b16 %v828
        %v903 = vunpack.c.l.b16 %v829
        %v904 = vunpack.c.l.b16 %v830
        %v905 = vunpack.c.l.b16 %v831
        %v906 = vunpack.c.l.b16 %v832
        %v907 = vunpack.c.l.b16 %v833
        %v908 = vunpack.c.l.b16 %v834
        %v909 = vunpack.c.l.b16 %v835
        %v910 = vunpack.c.l.b16 %v836
        %v911 = vunpack.c.l.b16 %v837
        %v912 = vunpack.c.l.b16 %v838
        %v913 = vunpack.c.l.b16 %v839
        %v914 = vunpack.c.l.b16 %v840
        %v915 = vunpack.c.l.b16 %v841
        %v916 = vunpack.c.l.b16 %v842
        %v917 = vunpack.c.l.b16 %v843
        %v918 = vunpack.c.l.b16 %v844
        %v919 = vunpack.c.l.b16 %v845
        %v920 = vpack.c.b16 %v889, %v888
        %v921 = vpack.c.b16 %v891, %v890
        %v922 = vpack.c.b16 %v893, %v892
        %v923 = vpack.c.b16 %v895, %v894
        %v924 = vpack.c.b16 %v897, %v896
        %v925 = vpack.c.b16 %v899, %v898
        %v926 = vpack.c.b16 %v901, %v900
        %v927 = vpack.c.b16 %v903, %v902
        %v928 = vpack.c.b16 %v905, %v904
        %v929 = vpack.c.b16 %v907, %v906
        %v930 = vpack.c.b16 %v909, %v908
        %v931 = vpack.c.b16 %v911, %v910
        %v932 = vpack.c.b16 %v913, %v912
        %v933 = vpack.c.b16 %v915, %v914
        %v934 = vpack.c.b16 %v917, %v916
        %v935 = vpack.c.b16 %v919, %v918
        %952 = vmatprep.subr.bf16.mxu0 0
        %953 = vmatpush1.bf16.msra.mxu0 %v927
        %954 = vmatprep.subr.bf16.mxu0 0
        %955 = vmatpush1.bf16.msra.mxu0 %v926
        %956 = vmatprep.subr.bf16.mxu0 0
        %957 = vmatpush1.bf16.msra.mxu0 %v925
        %958 = vmatprep.subr.bf16.mxu0 0
        %959 = vmatpush1.bf16.msra.mxu0 %v924
        %960 = vmatprep.subr.bf16.mxu0 0
        %961 = vmatpush1.bf16.msra.mxu0 %v923
        %962 = vmatprep.subr.bf16.mxu0 0
        %963 = vmatpush1.bf16.msra.mxu0 %v922
        %964 = vmatprep.subr.bf16.mxu0 0
        %965 = vmatpush1.bf16.msra.mxu0 %v921
        %966 = vmatprep.subr.bf16.mxu0 0
        %967 = vmatpush1.bf16.msra.mxu0 %v920
        %968 = vmatprep.subr.bf16.mxu0 0
        %969 = vmatpush2.bf16.msra.mxu0 %v935
        %970 = vmatprep.subr.bf16.mxu0 0
        %971 = vmatpush2.bf16.msra.mxu0 %v934
        %972 = vmatprep.subr.bf16.mxu0 0
        %973 = vmatpush2.bf16.msra.mxu0 %v933
        %974 = vmatprep.subr.bf16.mxu0 0
        %975 = vmatpush2.bf16.msra.mxu0 %v932
        %976 = vmatprep.subr.bf16.mxu0 0
        %977 = vmatpush2.bf16.msra.mxu0 %v931
        %978 = vmatprep.subr.bf16.mxu0 0
        %979 = vmatpush2.bf16.msra.mxu0 %v930
        %980 = vmatprep.subr.bf16.mxu0 0
        %981 = vmatpush2.bf16.msra.mxu0 %v929
        %982 = vmatprep.subr.bf16.mxu0 0
        %983 = vmatpush2.bf16.msra.mxu0 %v928
        %984 = vmatprep.mubr.bf16.mxu0 %v853
        %985 = vmatmul.mubr.bf16.gmra.mxu0 %v852
        %v986 = vpop.f32.mrf.mxu0
        %v987 = vadd.f32 0.0, %v986
        %v988 = vpop.f32.mrf.mxu0
        %v989 = vpop.f32.mrf.mxu0
        %v990 = vadd.f32 0.0, %v989
        %v991 = vpop.f32.mrf.mxu0
        %992 = vdwg.mxu0
        %v993 = vld [vmem:[%s572] sm:$0xff]
        %v994 = vld [vmem:[%s572 + $0x8] sm:$0xff]
        %v997 = vunpack.c.l.b16 %v993
        %v998 = vunpack.c.h.b16 %v993
        %v999 = vunpack.c.l.b16 %v994
        %v1000 = vunpack.c.h.b16 %v994
        %v1001 = vpack.c.b16 %v999, %v997
        %v1002 = vpack.c.b16 %v1000, %v998
        %1005 = vmatprep.subr.bf16.mxu0 0
        %1006 = vmatpush1.bf16.msra.mxu0 %v927
        %1007 = vmatprep.subr.bf16.mxu0 0
        %1008 = vmatpush1.bf16.msra.mxu0 %v926
        %1009 = vmatprep.subr.bf16.mxu0 0
        %1010 = vmatpush1.bf16.msra.mxu0 %v925
        %1011 = vmatprep.subr.bf16.mxu0 0
        %1012 = vmatpush1.bf16.msra.mxu0 %v924
        %1013 = vmatprep.subr.bf16.mxu0 0
        %1014 = vmatpush1.bf16.msra.mxu0 %v923
        %1015 = vmatprep.subr.bf16.mxu0 0
        %1016 = vmatpush1.bf16.msra.mxu0 %v922
        %1017 = vmatprep.subr.bf16.mxu0 0
        %1018 = vmatpush1.bf16.msra.mxu0 %v921
        %1019 = vmatprep.subr.bf16.mxu0 0
        %1020 = vmatpush1.bf16.msra.mxu0 %v920
        %1021 = vmatprep.subr.bf16.mxu0 0
        %1022 = vmatpush2.bf16.msra.mxu0 %v935
        %1023 = vmatprep.subr.bf16.mxu0 0
        %1024 = vmatpush2.bf16.msra.mxu0 %v934
        %1025 = vmatprep.subr.bf16.mxu0 0
        %1026 = vmatpush2.bf16.msra.mxu0 %v933
        %1027 = vmatprep.subr.bf16.mxu0 0
        %1028 = vmatpush2.bf16.msra.mxu0 %v932
        %1029 = vmatprep.subr.bf16.mxu0 0
        %1030 = vmatpush2.bf16.msra.mxu0 %v931
        %1031 = vmatprep.subr.bf16.mxu0 0
        %1032 = vmatpush2.bf16.msra.mxu0 %v930
        %1033 = vmatprep.subr.bf16.mxu0 0
        %1034 = vmatpush2.bf16.msra.mxu0 %v929
        %1035 = vmatprep.subr.bf16.mxu0 0
        %1036 = vmatpush2.bf16.msra.mxu0 %v928
        %1037 = vmatprep.mubr.bf16.mxu0 %v1002
        %1038 = vmatmul.mubr.bf16.gmra.mxu0 %v1001
        %v1039 = vpop.f32.mrf.mxu0
        %v1040 = vadd.f32 0.0, %v1039
        %v1041 = vpop.f32.mrf.mxu0
        %v1042 = vpop.f32.mrf.mxu0
        %v1043 = vadd.f32 0.0, %v1042
        %v1044 = vpop.f32.mrf.mxu0
        %1045 = vdwg.mxu0
        %v1046 = vsub.f32 %v650, %v987
        %v1047 = vsub.f32 %v653, %v990
        %v1048 = vsub.f32 %v701, %v1040
        %v1049 = vsub.f32 %v704, %v1043
        %v1050 = vld [vmem:[%s10] sm:$0xff]
        %v1051 = vld [vmem:[%s10 + $0x8] sm:$0xff]
        %v1052 = vld [vmem:[%s10 + $0x10] sm:$0xff]
        %v1053 = vld [vmem:[%s10 + $0x18] sm:$0xff]
        %v1054 = vld [vmem:[%s10 + $0x20] sm:$0xff]
        %v1055 = vld [vmem:[%s10 + $0x28] sm:$0xff]
        %v1056 = vld [vmem:[%s10 + $0x30] sm:$0xff]
        %v1057 = vld [vmem:[%s10 + $0x38] sm:$0xff]
        %v1058 = vld [vmem:[%s10 + $0x40] sm:$0xff]
        %v1059 = vld [vmem:[%s10 + $0x48] sm:$0xff]
        %v1060 = vld [vmem:[%s10 + $0x50] sm:$0xff]
        %v1061 = vld [vmem:[%s10 + $0x58] sm:$0xff]
        %v1062 = vld [vmem:[%s10 + $0x60] sm:$0xff]
        %v1063 = vld [vmem:[%s10 + $0x68] sm:$0xff]
        %v1064 = vld [vmem:[%s10 + $0x70] sm:$0xff]
        %v1065 = vld [vmem:[%s10 + $0x78] sm:$0xff]
        %v1066 = vmul.f32 %v1046, %v806
        %v1067 = vmul.f32 %v1047, %v809
        %v1068 = vmul.f32 %v1048, %v765
        %v1069 = vmul.f32 %v1049, %v768
        %v1070 = vmul.f32 %v1046, %v1046
        %v1071 = vmul.f32 %v1047, %v1047
        %1072 = vmatprep.subr.mxu0 0.0
        %1073 = vmatpush1.msra.mxu0 %v1065
        %1074 = vmatprep.subr.mxu0 0.0
        %1075 = vmatpush1.msra.mxu0 %v1064
        %1076 = vmatprep.subr.mxu0 0.0
        %1077 = vmatpush1.msra.mxu0 %v1063
        %1078 = vmatprep.subr.mxu0 0.0
        %1079 = vmatpush1.msra.mxu0 %v1062
        %1080 = vmatprep.subr.mxu0 0.0
        %1081 = vmatpush1.msra.mxu0 %v1061
        %1082 = vmatprep.subr.mxu0 0.0
        %1083 = vmatpush1.msra.mxu0 %v1060
        %1084 = vmatprep.subr.mxu0 0.0
        %1085 = vmatpush1.msra.mxu0 %v1059
        %1086 = vmatprep.subr.mxu0 0.0
        %1087 = vmatpush1.msra.mxu0 %v1058
        %1088 = vmatprep.subr.mxu0 0.0
        %1089 = vmatpush1.msra.mxu0 %v1057
        %1090 = vmatprep.subr.mxu0 0.0
        %1091 = vmatpush1.msra.mxu0 %v1056
        %1092 = vmatprep.subr.mxu0 0.0
        %1093 = vmatpush1.msra.mxu0 %v1055
        %1094 = vmatprep.subr.mxu0 0.0
        %1095 = vmatpush1.msra.mxu0 %v1054
        %1096 = vmatprep.subr.mxu0 0.0
        %1097 = vmatpush1.msra.mxu0 %v1053
        %1098 = vmatprep.subr.mxu0 0.0
        %1099 = vmatpush1.msra.mxu0 %v1052
        %1100 = vmatprep.subr.mxu0 0.0
        %1101 = vmatpush1.msra.mxu0 %v1051
        %1102 = vmatprep.subr.mxu0 0.0
        %1103 = vmatpush1.msra.mxu0 %v1050
        %1104 = vmatprep.subr.mxu0 0.0
        %1105 = vmatpush2.msra.mxu0 0.0
        %1106 = vmatprep.subr.mxu0 0.0
        %1107 = vmatpush2.msra.mxu0 0.0
        %1108 = vmatprep.subr.mxu0 0.0
        %1109 = vmatpush2.msra.mxu0 0.0
        %1110 = vmatprep.subr.mxu0 0.0
        %1111 = vmatpush2.msra.mxu0 0.0
        %1112 = vmatprep.subr.mxu0 0.0
        %1113 = vmatpush2.msra.mxu0 0.0
        %1114 = vmatprep.subr.mxu0 0.0
        %1115 = vmatpush2.msra.mxu0 0.0
        %1116 = vmatprep.subr.mxu0 0.0
        %1117 = vmatpush2.msra.mxu0 0.0
        %1118 = vmatprep.subr.mxu0 0.0
        %1119 = vmatpush2.msra.mxu0 0.0
        %1120 = vmatprep.subr.mxu0 0.0
        %1121 = vmatpush2.msra.mxu0 0.0
        %1122 = vmatprep.subr.mxu0 0.0
        %1123 = vmatpush2.msra.mxu0 0.0
        %1124 = vmatprep.subr.mxu0 0.0
        %1125 = vmatpush2.msra.mxu0 0.0
        %1126 = vmatprep.subr.mxu0 0.0
        %1127 = vmatpush2.msra.mxu0 0.0
        %1128 = vmatprep.subr.mxu0 0.0
        %1129 = vmatpush2.msra.mxu0 0.0
        %1130 = vmatprep.subr.mxu0 0.0
        %1131 = vmatpush2.msra.mxu0 0.0
        %1132 = vmatprep.subr.mxu0 0.0
        %1133 = vmatpush2.msra.mxu0 0.0
        %1134 = vmatprep.subr.mxu0 0.0
        %1135 = vmatpush2.msra.mxu0 0.0
        %1136 = vmatprep.mubr.f32.mxu0 0.0
        %1137 = vmatmul.mubr.f32.gmra.mxu0 %v1070
        %v1138 = vpop.f32.mrf.mxu0
        %v1139 = vadd.f32 0.0, %v1138
        %v1140 = vpop.f32.mrf.mxu0
        %1141 = vmatprep.mubr.f32.mxu0 0.0
        %1142 = vmatmul.mubr.f32.gmra.mxu0 %v1071
        %v1143 = vpop.f32.mrf.mxu0
        %v1144 = vadd.f32 0.0, %v1143
        %v1145 = vpop.f32.mrf.mxu0
        %1146 = vdwg.mxu0
        %v1147 = vmul.f32 %v1048, %v1048
        %v1148 = vmul.f32 %v1049, %v1049
        %1149 = vmatprep.subr.mxu0 0.0
        %1150 = vmatpush1.msra.mxu0 %v1065
        %1151 = vmatprep.subr.mxu0 0.0
        %1152 = vmatpush1.msra.mxu0 %v1064
        %1153 = vmatprep.subr.mxu0 0.0
        %1154 = vmatpush1.msra.mxu0 %v1063
        %1155 = vmatprep.subr.mxu0 0.0
        %1156 = vmatpush1.msra.mxu0 %v1062
        %1157 = vmatprep.subr.mxu0 0.0
        %1158 = vmatpush1.msra.mxu0 %v1061
        %1159 = vmatprep.subr.mxu0 0.0
        %1160 = vmatpush1.msra.mxu0 %v1060
        %1161 = vmatprep.subr.mxu0 0.0
        %1162 = vmatpush1.msra.mxu0 %v1059
        %1163 = vmatprep.subr.mxu0 0.0
        %1164 = vmatpush1.msra.mxu0 %v1058
        %1165 = vmatprep.subr.mxu0 0.0
        %1166 = vmatpush1.msra.mxu0 %v1057
        %1167 = vmatprep.subr.mxu0 0.0
        %1168 = vmatpush1.msra.mxu0 %v1056
        %1169 = vmatprep.subr.mxu0 0.0
        %1170 = vmatpush1.msra.mxu0 %v1055
        %1171 = vmatprep.subr.mxu0 0.0
        %1172 = vmatpush1.msra.mxu0 %v1054
        %1173 = vmatprep.subr.mxu0 0.0
        %1174 = vmatpush1.msra.mxu0 %v1053
        %1175 = vmatprep.subr.mxu0 0.0
        %1176 = vmatpush1.msra.mxu0 %v1052
        %1177 = vmatprep.subr.mxu0 0.0
        %1178 = vmatpush1.msra.mxu0 %v1051
        %1179 = vmatprep.subr.mxu0 0.0
        %1180 = vmatpush1.msra.mxu0 %v1050
        %1181 = vmatprep.subr.mxu0 0.0
        %1182 = vmatpush2.msra.mxu0 0.0
        %1183 = vmatprep.subr.mxu0 0.0
        %1184 = vmatpush2.msra.mxu0 0.0
        %1185 = vmatprep.subr.mxu0 0.0
        %1186 = vmatpush2.msra.mxu0 0.0
        %1187 = vmatprep.subr.mxu0 0.0
        %1188 = vmatpush2.msra.mxu0 0.0
        %1189 = vmatprep.subr.mxu0 0.0
        %1190 = vmatpush2.msra.mxu0 0.0
        %1191 = vmatprep.subr.mxu0 0.0
        %1192 = vmatpush2.msra.mxu0 0.0
        %1193 = vmatprep.subr.mxu0 0.0
        %1194 = vmatpush2.msra.mxu0 0.0
        %1195 = vmatprep.subr.mxu0 0.0
        %1196 = vmatpush2.msra.mxu0 0.0
        %1197 = vmatprep.subr.mxu0 0.0
        %1198 = vmatpush2.msra.mxu0 0.0
        %1199 = vmatprep.subr.mxu0 0.0
        %1200 = vmatpush2.msra.mxu0 0.0
        %1201 = vmatprep.subr.mxu0 0.0
        %1202 = vmatpush2.msra.mxu0 0.0
        %1203 = vmatprep.subr.mxu0 0.0
        %1204 = vmatpush2.msra.mxu0 0.0
        %1205 = vmatprep.subr.mxu0 0.0
        %1206 = vmatpush2.msra.mxu0 0.0
        %1207 = vmatprep.subr.mxu0 0.0
        %1208 = vmatpush2.msra.mxu0 0.0
        %1209 = vmatprep.subr.mxu0 0.0
        %1210 = vmatpush2.msra.mxu0 0.0
        %1211 = vmatprep.subr.mxu0 0.0
        %1212 = vmatpush2.msra.mxu0 0.0
        %1213 = vmatprep.mubr.f32.mxu0 0.0
        %1214 = vmatmul.mubr.f32.gmra.mxu0 %v1147
        %v1215 = vpop.f32.mrf.mxu0
        %v1216 = vadd.f32 0.0, %v1215
        %v1217 = vpop.f32.mrf.mxu0
        %1218 = vmatprep.mubr.f32.mxu0 0.0
        %1219 = vmatmul.mubr.f32.gmra.mxu0 %v1148
        %v1220 = vpop.f32.mrf.mxu0
        %v1221 = vadd.f32 0.0, %v1220
        %v1222 = vpop.f32.mrf.mxu0
        %1223 = vdwg.mxu0
        %s1224 = sld [smem:[#allocation9]]
        %s1225 = sld [smem:[#allocation9 + $0x1]]
        %v1226 = vld [vmem:[%s578] sm:$0xff]
        %v1227 = vld [vmem:[%s578 + $0x8] sm:$0xff]
        %v1228 = vstv %s1224
        %v1229 = vmul.f32 %v1228, %v1226
        %v1230 = vmul.f32 %v1228, %v1227
        %v1231 = vstv %s1225
        %v1232 = vadd.f32 %v1229, %v1231
        %v1233 = vadd.f32 %v1230, %v1231
        %1234 = vmatprep.subr.mxu0 0.0
        %1235 = vmatpush1.msra.mxu0 %v1065
        %1236 = vmatprep.subr.mxu0 0.0
        %1237 = vmatpush1.msra.mxu0 %v1064
        %1238 = vmatprep.subr.mxu0 0.0
        %1239 = vmatpush1.msra.mxu0 %v1063
        %1240 = vmatprep.subr.mxu0 0.0
        %1241 = vmatpush1.msra.mxu0 %v1062
        %1242 = vmatprep.subr.mxu0 0.0
        %1243 = vmatpush1.msra.mxu0 %v1061
        %1244 = vmatprep.subr.mxu0 0.0
        %1245 = vmatpush1.msra.mxu0 %v1060
        %1246 = vmatprep.subr.mxu0 0.0
        %1247 = vmatpush1.msra.mxu0 %v1059
        %1248 = vmatprep.subr.mxu0 0.0
        %1249 = vmatpush1.msra.mxu0 %v1058
        %1250 = vmatprep.subr.mxu0 0.0
        %1251 = vmatpush1.msra.mxu0 %v1057
        %1252 = vmatprep.subr.mxu0 0.0
        %1253 = vmatpush1.msra.mxu0 %v1056
        %1254 = vmatprep.subr.mxu0 0.0
        %1255 = vmatpush1.msra.mxu0 %v1055
        %1256 = vmatprep.subr.mxu0 0.0
        %1257 = vmatpush1.msra.mxu0 %v1054
        %1258 = vmatprep.subr.mxu0 0.0
        %1259 = vmatpush1.msra.mxu0 %v1053
        %1260 = vmatprep.subr.mxu0 0.0
        %1261 = vmatpush1.msra.mxu0 %v1052
        %1262 = vmatprep.subr.mxu0 0.0
        %1263 = vmatpush1.msra.mxu0 %v1051
        %1264 = vmatprep.subr.mxu0 0.0
        %1265 = vmatpush1.msra.mxu0 %v1050
        %1266 = vmatprep.subr.mxu0 0.0
        %1267 = vmatpush2.msra.mxu0 0.0
        %1268 = vmatprep.subr.mxu0 0.0
        %1269 = vmatpush2.msra.mxu0 0.0
        %1270 = vmatprep.subr.mxu0 0.0
        %1271 = vmatpush2.msra.mxu0 0.0
        %1272 = vmatprep.subr.mxu0 0.0
        %1273 = vmatpush2.msra.mxu0 0.0
        %1274 = vmatprep.subr.mxu0 0.0
        %1275 = vmatpush2.msra.mxu0 0.0
        %1276 = vmatprep.subr.mxu0 0.0
        %1277 = vmatpush2.msra.mxu0 0.0
        %1278 = vmatprep.subr.mxu0 0.0
        %1279 = vmatpush2.msra.mxu0 0.0
        %1280 = vmatprep.subr.mxu0 0.0
        %1281 = vmatpush2.msra.mxu0 0.0
        %1282 = vmatprep.subr.mxu0 0.0
        %1283 = vmatpush2.msra.mxu0 0.0
        %1284 = vmatprep.subr.mxu0 0.0
        %1285 = vmatpush2.msra.mxu0 0.0
        %1286 = vmatprep.subr.mxu0 0.0
        %1287 = vmatpush2.msra.mxu0 0.0
        %1288 = vmatprep.subr.mxu0 0.0
        %1289 = vmatpush2.msra.mxu0 0.0
        %1290 = vmatprep.subr.mxu0 0.0
        %1291 = vmatpush2.msra.mxu0 0.0
        %1292 = vmatprep.subr.mxu0 0.0
        %1293 = vmatpush2.msra.mxu0 0.0
        %1294 = vmatprep.subr.mxu0 0.0
        %1295 = vmatpush2.msra.mxu0 0.0
        %1296 = vmatprep.subr.mxu0 0.0
        %1297 = vmatpush2.msra.mxu0 0.0
        %1298 = vmatprep.mubr.f32.mxu0 0.0
        %1299 = vmatmul.mubr.f32.gmra.mxu0 %v1066
        %v1300 = vpop.f32.mrf.mxu0
        %v1301 = vadd.f32 %v1232, %v1300
        %v1302 = vpop.f32.mrf.mxu0
        %1303 = vmatprep.mubr.f32.mxu0 0.0
        %1304 = vmatmul.mubr.f32.gmra.mxu0 %v1067
        %v1305 = vpop.f32.mrf.mxu0
        %v1306 = vadd.f32 %v1233, %v1305
        %v1307 = vpop.f32.mrf.mxu0
        %1308 = vdwg.mxu0
        %v1309 = vld [vmem:[%s584] sm:$0xff]
        %v1310 = vld [vmem:[%s584 + $0x8] sm:$0xff]
        %v1311 = vmul.f32 %v1228, %v1309
        %v1312 = vmul.f32 %v1228, %v1310
        %v1313 = vadd.f32 %v1311, %v1231
        %v1314 = vadd.f32 %v1312, %v1231
        %1315 = vmatprep.subr.mxu0 0.0
        %1316 = vmatpush1.msra.mxu0 %v1065
        %1317 = vmatprep.subr.mxu0 0.0
        %1318 = vmatpush1.msra.mxu0 %v1064
        %1319 = vmatprep.subr.mxu0 0.0
        %1320 = vmatpush1.msra.mxu0 %v1063
        %1321 = vmatprep.subr.mxu0 0.0
        %1322 = vmatpush1.msra.mxu0 %v1062
        %1323 = vmatprep.subr.mxu0 0.0
        %1324 = vmatpush1.msra.mxu0 %v1061
        %1325 = vmatprep.subr.mxu0 0.0
        %1326 = vmatpush1.msra.mxu0 %v1060
        %1327 = vmatprep.subr.mxu0 0.0
        %1328 = vmatpush1.msra.mxu0 %v1059
        %1329 = vmatprep.subr.mxu0 0.0
        %1330 = vmatpush1.msra.mxu0 %v1058
        %1331 = vmatprep.subr.mxu0 0.0
        %1332 = vmatpush1.msra.mxu0 %v1057
        %1333 = vmatprep.subr.mxu0 0.0
        %1334 = vmatpush1.msra.mxu0 %v1056
        %1335 = vmatprep.subr.mxu0 0.0
        %1336 = vmatpush1.msra.mxu0 %v1055
        %1337 = vmatprep.subr.mxu0 0.0
        %1338 = vmatpush1.msra.mxu0 %v1054
        %1339 = vmatprep.subr.mxu0 0.0
        %1340 = vmatpush1.msra.mxu0 %v1053
        %1341 = vmatprep.subr.mxu0 0.0
        %1342 = vmatpush1.msra.mxu0 %v1052
        %1343 = vmatprep.subr.mxu0 0.0
        %1344 = vmatpush1.msra.mxu0 %v1051
        %1345 = vmatprep.subr.mxu0 0.0
        %1346 = vmatpush1.msra.mxu0 %v1050
        %1347 = vmatprep.subr.mxu0 0.0
        %1348 = vmatpush2.msra.mxu0 0.0
        %1349 = vmatprep.subr.mxu0 0.0
        %1350 = vmatpush2.msra.mxu0 0.0
        %1351 = vmatprep.subr.mxu0 0.0
        %1352 = vmatpush2.msra.mxu0 0.0
        %1353 = vmatprep.subr.mxu0 0.0
        %1354 = vmatpush2.msra.mxu0 0.0
        %1355 = vmatprep.subr.mxu0 0.0
        %1356 = vmatpush2.msra.mxu0 0.0
        %1357 = vmatprep.subr.mxu0 0.0
        %1358 = vmatpush2.msra.mxu0 0.0
        %1359 = vmatprep.subr.mxu0 0.0
        %1360 = vmatpush2.msra.mxu0 0.0
        %1361 = vmatprep.subr.mxu0 0.0
        %1362 = vmatpush2.msra.mxu0 0.0
        %1363 = vmatprep.subr.mxu0 0.0
        %1364 = vmatpush2.msra.mxu0 0.0
        %1365 = vmatprep.subr.mxu0 0.0
        %1366 = vmatpush2.msra.mxu0 0.0
        %1367 = vmatprep.subr.mxu0 0.0
        %1368 = vmatpush2.msra.mxu0 0.0
        %1369 = vmatprep.subr.mxu0 0.0
        %1370 = vmatpush2.msra.mxu0 0.0
        %1371 = vmatprep.subr.mxu0 0.0
        %1372 = vmatpush2.msra.mxu0 0.0
        %1373 = vmatprep.subr.mxu0 0.0
        %1374 = vmatpush2.msra.mxu0 0.0
        %1375 = vmatprep.subr.mxu0 0.0
        %1376 = vmatpush2.msra.mxu0 0.0
        %1377 = vmatprep.subr.mxu0 0.0
        %1378 = vmatpush2.msra.mxu0 0.0
        %1379 = vmatprep.mubr.f32.mxu0 0.0
        %1380 = vmatmul.mubr.f32.gmra.mxu0 %v1068
        %v1381 = vpop.f32.mrf.mxu0
        %v1382 = vadd.f32 %v1313, %v1381
        %v1383 = vpop.f32.mrf.mxu0
        %1384 = vmatprep.mubr.f32.mxu0 0.0
        %1385 = vmatmul.mubr.f32.gmra.mxu0 %v1069
        %v1386 = vpop.f32.mrf.mxu0
        %v1387 = vadd.f32 %v1314, %v1386
        %v1388 = vpop.f32.mrf.mxu0
        %1389 = vdwg.mxu0
        %v1390 = vrsqrt.pop %v1139
        %v1391 = vmul.f32 %v1139, %v1390
        %vm1392 = vcmp.eq.f32.partialorder %v1139, inf
        %v1393 = vsel %vm1392, %v1139, %v1391
        %vm1394 = vcmp.eq.f32.partialorder %v1139, 0.0
        %v1395 = vand.u32 %v1139, 2147483648
        %v1396 = vsel %vm1394, %v1395, %v1393
        %v1397 = vrsqrt.pop %v1144
        %v1398 = vmul.f32 %v1144, %v1397
        %vm1399 = vcmp.eq.f32.partialorder %v1144, inf
        %v1400 = vsel %vm1399, %v1144, %v1398
        %vm1401 = vcmp.eq.f32.partialorder %v1144, 0.0
        %v1402 = vand.u32 %v1144, 2147483648
        %v1403 = vsel %vm1401, %v1402, %v1400
        %v1404 = vrsqrt.pop %v1216
        %v1405 = vmul.f32 %v1216, %v1404
        %vm1406 = vcmp.eq.f32.partialorder %v1216, inf
        %v1407 = vsel %vm1406, %v1216, %v1405
        %vm1408 = vcmp.eq.f32.partialorder %v1216, 0.0
        %v1409 = vand.u32 %v1216, 2147483648
        %v1410 = vsel %vm1408, %v1409, %v1407
        %v1411 = vrsqrt.pop %v1221
        %v1412 = vmul.f32 %v1221, %v1411
        %vm1413 = vcmp.eq.f32.partialorder %v1221, inf
        %v1414 = vsel %vm1413, %v1221, %v1412
        %vm1415 = vcmp.eq.f32.partialorder %v1221, 0.0
        %v1416 = vand.u32 %v1221, 2147483648
        %v1417 = vsel %vm1415, %v1416, %v1414
        %v1418 = vsub.f32 0.0, %v1396
        %v1419 = vsub.f32 0.0, %v1403
        %vm1420 = vcmask 64512
        %v1421 = vsel %vm1420, %v1418, -inf
        %1422 = vmax.xlane.f32.xlu0 %v1421
        %v1423 = vpop.xlane.xlu0 %1422
        %v1424 = vsel %vm1420, %v1419, -inf
        %1425 = vmax.xlane.f32.xlu0 %v1424
        %v1426 = vpop.xlane.xlu0 %1425
        %v1427 = vsub.f32 0.0, %v1410
        %v1428 = vsub.f32 0.0, %v1417
        %v1429 = vsel %vm1420, %v1427, -inf
        %1430 = vmax.xlane.f32.xlu0 %v1429
        %v1431 = vpop.xlane.xlu0 %1430
        %v1432 = vsel %vm1420, %v1428, -inf
        %1433 = vmax.xlane.f32.xlu0 %v1432
        %v1434 = vpop.xlane.xlu0 %1433
        %v1435 = vmax.f32 %v1423, %v1431
        %v1436 = vmax.f32 %v1426, %v1434
        %v1437 = vmax.f32 %v1435, -1.0
        %v1438 = vmax.f32 %v1436, -1.0
        %v1439 = vsub.f32 %v1418, %v1437
        %v1440 = vsub.f32 %v1419, %v1438
        %v1441 = vmul.f32 %v1439, 1.442695
        %v1442 = vpow.pop %v1441
        %v1443 = vmul.f32 %v1440, 1.442695
        %v1444 = vpow.pop %v1443
        %v1445 = vsub.f32 %v1427, %v1437
        %v1446 = vsub.f32 %v1428, %v1438
        %v1447 = vmul.f32 %v1445, 1.442695
        %v1448 = vpow.pop %v1447
        %v1449 = vmul.f32 %v1446, 1.442695
        %v1450 = vpow.pop %v1449
        %v1451 = vsub.f32 -1.0, %v1437
        %v1452 = vsub.f32 -1.0, %v1438
        %v1453 = vmul.f32 %v1451, 1.442695
        %v1454 = vpow.pop %v1453
        %v1455 = vmul.f32 %v1452, 1.442695
        %v1456 = vpow.pop %v1455
        %v1457 = vsel %vm1420, %v1442, 0.0
        %1458 = vadd.xlane.f32.xlu0 %v1457
        %v1459 = vpop.xlane.xlu0 %1458
        %v1460 = vsel %vm1420, %v1444, 0.0
        %1461 = vadd.xlane.f32.xlu0 %v1460
        %v1462 = vpop.xlane.xlu0 %1461
        %v1463 = vsel %vm1420, %v1448, 0.0
        %1464 = vadd.xlane.f32.xlu0 %v1463
        %v1465 = vpop.xlane.xlu0 %1464
        %v1466 = vsel %vm1420, %v1450, 0.0
        %1467 = vadd.xlane.f32.xlu0 %v1466
        %v1468 = vpop.xlane.xlu0 %1467
        %v1469 = vadd.f32 %v1459, %v1465
        %v1470 = vadd.f32 %v1462, %v1468
        %v1471 = vmul.f32 %v1454, 8.0
        %v1472 = vmul.f32 %v1456, 8.0
        %v1473 = vadd.f32 %v1469, %v1471
        %v1474 = vadd.f32 %v1470, %v1472
        %v1475 = vmul.f32 %v1301, %v1442
        %v1476 = vmul.f32 %v1306, %v1444
        %v1477 = vsel %vm1420, %v1475, 0.0
        %1478 = vadd.xlane.f32.xlu0 %v1477
        %v1479 = vpop.xlane.xlu0 %1478
        %v1480 = vsel %vm1420, %v1476, 0.0
        %1481 = vadd.xlane.f32.xlu0 %v1480
        %v1482 = vpop.xlane.xlu0 %1481
        %v1483 = vmul.f32 %v1382, %v1448
        %v1484 = vmul.f32 %v1387, %v1450
        %v1485 = vsel %vm1420, %v1483, 0.0
        %1486 = vadd.xlane.f32.xlu0 %v1485
        %v1487 = vpop.xlane.xlu0 %1486
        %v1488 = vsel %vm1420, %v1484, 0.0
        %1489 = vadd.xlane.f32.xlu0 %v1488
        %v1490 = vpop.xlane.xlu0 %1489
        %v1491 = vadd.f32 %v1479, %v1487
        %v1492 = vadd.f32 %v1482, %v1490
        %v1493 = vrcp.pop %v1473
        %v1494 = vmul.f32 %v1491, %v1493
        %v1495 = vrcp.pop %v1474
        %v1496 = vmul.f32 %v1492, %v1495
        %v1497 = vxor.u32 %v1494, 2147483648
        %v1498 = vxor.u32 %v1496, 2147483648
        %v1499 = vmul.f32 %v1497, 1.442695
        %v1500 = vpow.pop %v1499
        %v1501 = vmul.f32 %v1498, 1.442695
        %v1502 = vpow.pop %v1501
        %v1503 = vadd.f32 %v1500, 1.0
        %v1504 = vadd.f32 %v1502, 1.0
        %v1505 = vrcp.pop %v1503
        %v1506 = vmul.f32 1.0, %v1505
        %v1507 = vrcp.pop %v1504
        %v1508 = vmul.f32 1.0, %v1507
        %1509 = vst [vmem:[%s547] sm:$0xff] %v1506
        %1510 = vst [vmem:[%s547 + $0x8] sm:$0xff] %v1508
        %s1511 = sand.u32 %s319, 1
        %s1512 = scalar_lea.sflag [#allocation4], %s1511
        %s1513 = sand.u32 %s319, 1
        %s1514 = smul.addr %s1513, 16
        %s1515 = scalar_lea.vmem [#allocation10], %s1514
        // Predicated region
        $region85: #{tpu_custom_call.1} parent=67 // pred_check
          %p1516 = pneg %p329
        $region86: #{tpu_custom_call.1} parent=67 // pred_check_branch
          %1518 = sbr.rel (%p1516) target = $region88
        $region87: #{tpu_custom_call.1} parent=67 // pred_region
          %s1519 = smul.u32 2, %s29
          %s1521 = ssub.s32 256, 256
          %1522 = vsyncadd %s1512, %s1521
          %s1523 = smul.addr %s1519, 128
          %s1524 = scalar_lea.hbm %s12, %s1523
          %s1525 = sshll.u32 %s1515, 4
          %s1526 = int_to_ptr.vmem [resolvable:$true] %s1525
          %1531 = dma.vmem_to_hbm [thread:$0]  %s1526, 256, %s1524, %s1512, 128, 128, 8
        $region88: #{tpu_custom_call.1} parent=67 // pred_fallthru
          _
      $region68: #{tpu_custom_call.1} parent=5 // pred_fallthru
        _
      %p1532 = scmp.le.s32.totalorder 2, %s24
      // Predicated region
      $region89: #{tpu_custom_call.1} parent=5 // pred_check
        %p1533 = pneg %p1532
      $region90: #{tpu_custom_call.1} parent=5 // pred_check_branch
        %1535 = sbr.rel (%p1533) target = $region92
      $region91: #{tpu_custom_call.1} parent=5 // pred_region
        %s1536 = ssub.s32 %s24, 2
        // Predicated region
        $region93: #{tpu_custom_call.1} parent=91 // pred_check
          %p1537 = pneg %p335
        $region94: #{tpu_custom_call.1} parent=91 // pred_check_branch
          %1539 = sbr.rel (%p1537) target = $region96
        $region95: #{tpu_custom_call.1} parent=91 // pred_region
          %s1540 = sand.u32 %s320, 1
          %s1541 = scalar_lea.sflag [#allocation4], %s1540
          %s1542 = sand.u32 %s320, 1
          %s1543 = smul.addr %s1542, 16
          %s1544 = scalar_lea.vmem [#allocation10], %s1543
          %1545 = dma.done %s1541, 256
        $region96: #{tpu_custom_call.1} parent=91 // pred_fallthru
          _
      $region92: #{tpu_custom_call.1} parent=5 // pred_fallthru
        _
    $region6: #{tpu_custom_call.1} parent=1 // loop_footer
      %s28 = sadd.s32 1, %s24
    $region7: #{tpu_custom_call.1} parent=1 // loop_footer_branch
      %23 = sbr.rel target = $region3
    $region8: #{tpu_custom_call.1} parent=1 // loop_exit
      _
    %1546 = vsyncpa [#allocation3], 1
    %s1547 = scalar_lea.sflag [#allocation3], 1
    %1548 = vsyncpa %s1547, 1
    %1549 = vsyncpa [#allocation7], 1
    %1550 = vsyncpa [#allocation4], 1
    %s1551 = scalar_lea.sflag [#allocation4], 1
    %1552 = vsyncpa %s1551, 1
    %1553 = vsyncpa [#allocation5], 1
    %s1554 = scalar_lea.sflag [#allocation5], 1
    %1555 = vsyncpa %s1554, 1

</llo_original>
